<compile_context>
chip_gen: v5e
topology: v5e:2x2
jax: 0.10.0
libtpu: 0.0.40
codegen_flags: <defaults>
</compile_context>

<pallas_src>
import functools

import jax
import jax.numpy as jnp
from jax import lax
from jax.experimental import pallas as pl
from jax.experimental.pallas import tpu as pltpu


# ------------------------- fused Pallas kernel -------------------------

def _fused_ir_kernel(*refs, H, W, stride, expand, use_res):
    if expand:
        (x_ref, we_ref, s1_ref, b1_ref, wd_ref, s2_ref, b2_ref,
         wp_ref, s3_ref, b3_ref, o_ref, hp_ref) = refs
    else:
        (x_ref, wd_ref, s2_ref, b2_ref, wp_ref, s3_ref, b3_ref,
         o_ref, hp_ref) = refs

    Ho = (H - 1) // stride + 1
    Wo = (W - 1) // stride + 1

    x = x_ref[...]                                            # (H*W, Cin_pad) f32

    # ---- expand: 1x1 conv (MXU) + folded BN + ReLU6 (stays on-chip) ----
    if expand:
        h = jnp.dot(x, we_ref[...], preferred_element_type=jnp.float32)
        h = jnp.clip(h * s1_ref[...] + b1_ref[...], 0.0, 6.0)
    else:
        h = x
    C = h.shape[-1]                                           # hidden_pad (lane multiple)

    # ---- depthwise 3x3 + folded BN + ReLU6; zero halo built in VMEM scratch ----
    hp_ref[...] = jnp.zeros_like(hp_ref)                      # zero border (cheap)
    hp_ref[pl.ds(1, H), pl.ds(1, W), :] = h.reshape(H, W, C)  # interior

    acc = jnp.zeros((Ho, Wo, C), jnp.float32)
    if stride == 1:
        hp = hp_ref[...]                                      # (H+2, W+2, C)
        # Hoist the sublane-axis (W) shifts: 3 shifted views instead of 9.
        cols = [hp[:, dw:dw + W, :] for dw in range(3)]       # each (H+2, W, C)
        for dh in range(3):
            for dw in range(3):
                w_tap = wd_ref[pl.ds(dh * 3 + dw, 1), :].reshape(1, 1, C)
                acc = acc + cols[dw][dh:dh + H] * w_tap       # leading-axis shift: free
    else:
        # stride=2: strided taps straight from the padded scratch ref.
        for dh in range(3):
            for dw in range(3):
                w_tap = wd_ref[pl.ds(dh * 3 + dw, 1), :].reshape(1, 1, C)
                tap = hp_ref[pl.ds(dh, Ho, stride), pl.ds(dw, Wo, stride), :]
                acc = acc + tap * w_tap

    y = acc.reshape(Ho * Wo, C)
    y = jnp.clip(y * s2_ref[...] + b2_ref[...], 0.0, 6.0)

    # ---- project: 1x1 conv (MXU) + folded BN (+ residual), lane-dense store ----
    o = jnp.dot(y, wp_ref[...], preferred_element_type=jnp.float32)
    o = o * s3_ref[...] + b3_ref[...]
    if use_res:
        o = o + x                                             # Cin_pad == Cout_pad here
    o_ref[...] = o.astype(o_ref.dtype)


# ------------------------- wrapper -------------------------

def _round_up(v, m):
    return (v + m - 1) // m * m


def inverted_residual_forward(x_nchw, params, *, inp, oup, stride, expand_ratio):
    assert stride in (1, 2)
    expand = expand_ratio != 1
    hidden = int(round(inp * expand_ratio))
    use_res = (stride == 1) and (inp == oup)

    LANE = 128
    cin_p = _round_up(inp, LANE)
    hid_p = _round_up(hidden, LANE) if expand else cin_p
    cout_p = _round_up(oup, LANE)

    # TODO(synk): a full network would stay NHWC / channel-padded end-to-end and skip
    # this boundary transpose + pad (kept here to match the PyTorch NCHW interface).
    x = jnp.transpose(x_nchw, (0, 2, 3, 1)).astype(jnp.float32)   # NCHW -> NHWC
    N, H, W, _ = x.shape
    HW = H * W
    Ho = (H - 1) // stride + 1
    Wo = (W - 1) // stride + 1

    # Zero-pad channels to a lane multiple -> lane-dense loads / matmuls / stores.
    x2d = jnp.pad(x.reshape(N * HW, inp), ((0, 0), (0, cin_p - inp)))

    def pad2(a, r, c):
        return jnp.pad(a, ((0, r - a.shape[0]), (0, c - a.shape[1])))

    wd = pad2(params["w_dw"], 9, hid_p)
    s2, b2 = params["bn2"]
    s2, b2 = pad2(s2, 1, hid_p), pad2(b2, 1, hid_p)
    wp = pad2(params["w_proj"], hid_p, cout_p)
    s3, b3 = params["bn3"]
    s3, b3 = pad2(s3, 1, cout_p), pad2(b3, 1, cout_p)

    full = lambda shape: pl.BlockSpec(shape, lambda n: (0, 0))
    args = [x2d]
    in_specs = [pl.BlockSpec((HW, cin_p), lambda n: (n, 0))]
    if expand:
        we = pad2(params["w_expand"], cin_p, hid_p)
        s1, b1 = params["bn1"]
        s1, b1 = pad2(s1, 1, hid_p), pad2(b1, 1, hid_p)
        args += [we, s1, b1]
        in_specs += [full((cin_p, hid_p)), full((1, hid_p)), full((1, hid_p))]
    args += [wd, s2, b2, wp, s3, b3]
    in_specs += [full((9, hid_p)), full((1, hid_p)), full((1, hid_p)),
                 full((hid_p, cout_p)), full((1, cout_p)), full((1, cout_p))]

    kern = functools.partial(_fused_ir_kernel, H=H, W=W, stride=stride,
                             expand=expand, use_res=use_res)

    out2d = pl.pallas_call(
        kern,
        out_shape=jax.ShapeDtypeStruct((N * Ho * Wo, cout_p), jnp.float32),
        grid_spec=pltpu.PrefetchScalarGridSpec(
            num_scalar_prefetch=0,
            grid=(N,),
            in_specs=in_specs,
            out_specs=pl.BlockSpec((Ho * Wo, cout_p), lambda n: (n, 0)),
            scratch_shapes=[pltpu.VMEM((H + 2, W + 2, hid_p), jnp.float32)],
        ),
        compiler_params=pltpu.CompilerParams(
            dimension_semantics=("parallel",)),
    )(*args)

    out = out2d[:, :oup].reshape(N, Ho, Wo, oup)
    return jnp.transpose(out, (0, 3, 1, 2))                       # NHWC -> NCHW


# ------------------------- parameters -------------------------

def _bn_scale_bias(key, c, eps=1e-5):
    k1, k2, k3, k4 = jax.random.split(key, 4)
    gamma = jax.random.uniform(k1, (c,), jnp.float32, 0.5, 1.5)
    beta = 0.1 * jax.random.normal(k2, (c,), jnp.float32)
    mean = 0.1 * jax.random.normal(k3, (c,), jnp.float32)
    var = jax.random.uniform(k4, (c,), jnp.float32, 0.5, 1.5)
    scale = gamma / jnp.sqrt(var + eps)
    bias = beta - mean * scale
    return scale.reshape(1, c), bias.reshape(1, c)


def init_inverted_residual_params(key, inp, oup, expand_ratio):
    hidden = int(round(inp * expand_ratio))
    k = jax.random.split(key, 6)
    p = {}
    if expand_ratio != 1:
        p["w_expand"] = 0.1 * jax.random.normal(k[0], (inp, hidden), jnp.float32)
        p["bn1"] = _bn_scale_bias(k[1], hidden)
    p["w_dw"] = 0.1 * jax.random.normal(k[2], (9, hidden), jnp.float32)   # (3*3, hidden)
    p["bn2"] = _bn_scale_bias(k[3], hidden)
    p["w_proj"] = 0.1 * jax.random.normal(k[4], (hidden, oup), jnp.float32)
    p["bn3"] = _bn_scale_bias(k[5], oup)
    return p


# ------------------------- pure-JAX reference -------------------------

def reference_forward(x_nchw, params, *, inp, oup, stride, expand_ratio):
    hidden = int(round(inp * expand_ratio))
    use_res = (stride == 1) and (inp == oup)
    x = jnp.transpose(x_nchw, (0, 2, 3, 1)).astype(jnp.float32)
    h = x
    if expand_ratio != 1:
        s, b = params["bn1"]
        h = jnp.einsum("nhwc,cd->nhwd", h, params["w_expand"])
        h = jnp.clip(h * s.reshape(1, 1, 1, -1) + b.reshape(1, 1, 1, -1), 0.0, 6.0)
    wdw = params["w_dw"].reshape(3, 3, hidden)[:, :, None, :]      # (3,3,1,hidden)
    h = lax.conv_general_dilated(h, wdw, window_strides=(stride, stride),
                                 padding=((1, 1), (1, 1)),
                                 dimension_numbers=("NHWC", "HWIO", "NHWC"),
                                 feature_group_count=hidden)
    s, b = params["bn2"]
    h = jnp.clip(h * s.reshape(1, 1, 1, -1) + b.reshape(1, 1, 1, -1), 0.0, 6.0)
    s, b = params["bn3"]
    o = jnp.einsum("nhwc,cd->nhwd", h, params["w_proj"])
    o = o * s.reshape(1, 1, 1, -1) + b.reshape(1, 1, 1, -1)
    if use_res:
        o = o + x
    return jnp.transpose(o, (0, 3, 1, 2))


# ------------------------- main -------------------------

if __name__ == "__main__":
    key = jax.random.PRNGKey(0)

    configs = [
        dict(inp=4, oup=4, stride=1, expand_ratio=6),   # expanded block with residual
        dict(inp=4, oup=4, stride=1, expand_ratio=1),   # no-expand path
    ]
    for i, cfg in enumerate(configs):
        kx, kp = jax.random.split(jax.random.fold_in(key, i))
        x = jax.random.normal(kx, (2, cfg["inp"], 16, 16), jnp.float32)   # NCHW
        params = init_inverted_residual_params(kp, cfg["inp"], cfg["oup"],
                                               cfg["expand_ratio"])
        out = jax.block_until_ready(inverted_residual_forward(x, params, **cfg))
        ho = (16 - 1) // cfg["stride"] + 1
        assert out.shape == (2, cfg["oup"], ho, ho)
        ref = reference_forward(x, params, **cfg)
        max_err = float(jnp.max(jnp.abs(out - ref)))
        assert jnp.allclose(out, ref, atol=1e-4, rtol=1e-4), f"cfg={cfg} max_err={max_err}"

    print("KERNEL_OK")
</pallas_src>

<mosaic_0001>
module attributes {stable_mosaic.version = 11 : i64} {
  func.func @_fused_ir_kernel(%arg0: i32, %arg1: memref<256x128xf32, #tpu.memory_space<vmem>>, %arg2: memref<128x128xf32, #tpu.memory_space<vmem>>, %arg3: memref<1x128xf32, #tpu.memory_space<vmem>>, %arg4: memref<1x128xf32, #tpu.memory_space<vmem>>, %arg5: memref<9x128xf32, #tpu.memory_space<vmem>>, %arg6: memref<1x128xf32, #tpu.memory_space<vmem>>, %arg7: memref<1x128xf32, #tpu.memory_space<vmem>>, %arg8: memref<128x128xf32, #tpu.memory_space<vmem>>, %arg9: memref<1x128xf32, #tpu.memory_space<vmem>>, %arg10: memref<1x128xf32, #tpu.memory_space<vmem>>, %arg11: memref<256x128xf32, #tpu.memory_space<vmem>>, %arg12: memref<18x18x128xf32, #tpu.memory_space<vmem>>) attributes {dimension_semantics = [#tpu.dimension_semantics<parallel>], iteration_bounds = array<i64: 2>, scalar_prefetch = 0 : i64, scratch_operands = 1 : i64, tpu.core_type = #tpu.core_type<tc>, window_params = [{transform_indices = @transform_0, window_bounds = array<i64: 256, 128>}, {pipeline_mode = #tpu.pipeline_mode<synchronous>, transform_indices = @transform_1, window_bounds = array<i64: 128, 128>}, {pipeline_mode = #tpu.pipeline_mode<synchronous>, transform_indices = @transform_2, window_bounds = array<i64: 1, 128>}, {pipeline_mode = #tpu.pipeline_mode<synchronous>, transform_indices = @transform_3, window_bounds = array<i64: 1, 128>}, {pipeline_mode = #tpu.pipeline_mode<synchronous>, transform_indices = @transform_4, window_bounds = array<i64: 9, 128>}, {pipeline_mode = #tpu.pipeline_mode<synchronous>, transform_indices = @transform_5, window_bounds = array<i64: 1, 128>}, {pipeline_mode = #tpu.pipeline_mode<synchronous>, transform_indices = @transform_6, window_bounds = array<i64: 1, 128>}, {pipeline_mode = #tpu.pipeline_mode<synchronous>, transform_indices = @transform_7, window_bounds = array<i64: 128, 128>}, {pipeline_mode = #tpu.pipeline_mode<synchronous>, transform_indices = @transform_8, window_bounds = array<i64: 1, 128>}, {pipeline_mode = #tpu.pipeline_mode<synchronous>, transform_indices = @transform_9, window_bounds = array<i64: 1, 128>}, {transform_indices = @transform_10, window_bounds = array<i64: 256, 128>}]} {
    %c0 = arith.constant 0 : index
    %c0_0 = arith.constant 0 : index
    %0 = vector.load %arg1[%c0, %c0_0] : memref<256x128xf32, #tpu.memory_space<vmem>>, vector<256x128xf32>
    %c0_1 = arith.constant 0 : index
    %c0_2 = arith.constant 0 : index
    %1 = vector.load %arg2[%c0_1, %c0_2] : memref<128x128xf32, #tpu.memory_space<vmem>>, vector<128x128xf32>
    %cst = arith.constant dense<0.000000e+00> : vector<256x128xf32>
    %2 = tpu.matmul %0, %1, %cst {dimension_numbers = #tpu.dot_dimension_numbers<[1], [0], [0], [1], [0, 0, 1, 1], [], []>} : vector<256x128xf32>, vector<128x128xf32>, vector<256x128xf32> -> vector<256x128xf32>
    %c0_3 = arith.constant 0 : index
    %c0_4 = arith.constant 0 : index
    %3 = vector.load %arg3[%c0_3, %c0_4] : memref<1x128xf32, #tpu.memory_space<vmem>>, vector<1x128xf32>
    %4 = vector.broadcast %3 : vector<1x128xf32> to vector<256x128xf32>
    %5 = arith.mulf %2, %4 : vector<256x128xf32>
    %c0_5 = arith.constant 0 : index
    %c0_6 = arith.constant 0 : index
    %6 = vector.load %arg4[%c0_5, %c0_6] : memref<1x128xf32, #tpu.memory_space<vmem>>, vector<1x128xf32>
    %7 = vector.broadcast %6 : vector<1x128xf32> to vector<256x128xf32>
    %8 = arith.addf %5, %7 : vector<256x128xf32>
    %cst_7 = arith.constant 0.000000e+00 : f32
    %cst_8 = arith.constant 6.000000e+00 : f32
    %9 = vector.broadcast %cst_7 : f32 to vector<256x128xf32>
    %10 = arith.maximumf %9, %8 : vector<256x128xf32>
    %11 = vector.broadcast %cst_8 : f32 to vector<256x128xf32>
    %12 = arith.minimumf %11, %10 : vector<256x128xf32>
    %cst_9 = arith.constant 0.000000e+00 : f32
    %13 = vector.broadcast %cst_9 : f32 to vector<18x18x128xf32>
    %c0_10 = arith.constant 0 : index
    %c0_11 = arith.constant 0 : index
    %c0_12 = arith.constant 0 : index
    %14 = vector.load %arg12[%c0_10, %c0_11, %c0_12] : memref<18x18x128xf32, #tpu.memory_space<vmem>>, vector<18x18x128xf32>
    tpu.vector_store %arg12[%c0_10, %c0_11, %c0_12], %13 {strides = array<i32>} : memref<18x18x128xf32, #tpu.memory_space<vmem>>, vector<18x18x128xf32>,
    %15 = vector.shape_cast %12 : vector<256x128xf32> to vector<16x16x128xf32>
    %c1 = arith.constant 1 : index
    %c1_13 = arith.constant 1 : index
    %c0_14 = arith.constant 0 : index
    %16 = vector.load %arg12[%c1, %c1_13, %c0_14] : memref<18x18x128xf32, #tpu.memory_space<vmem>>, vector<16x16x128xf32>
    tpu.vector_store %arg12[%c1, %c1_13, %c0_14], %15 {strides = array<i32>} : memref<18x18x128xf32, #tpu.memory_space<vmem>>, vector<16x16x128xf32>,
    %cst_15 = arith.constant 0.000000e+00 : f32
    %17 = vector.broadcast %cst_15 : f32 to vector<16x16x128xf32>
    %c0_16 = arith.constant 0 : index
    %c0_17 = arith.constant 0 : index
    %c0_18 = arith.constant 0 : index
    %18 = vector.load %arg12[%c0_16, %c0_17, %c0_18] : memref<18x18x128xf32, #tpu.memory_space<vmem>>, vector<18x18x128xf32>
    %19 = vector.extract_strided_slice %18 {offsets = [0, 0, 0], sizes = [18, 16, 128], strides = [1, 1, 1]} : vector<18x18x128xf32> to vector<18x16x128xf32>
    %20 = vector.extract_strided_slice %18 {offsets = [0, 1, 0], sizes = [18, 16, 128], strides = [1, 1, 1]} : vector<18x18x128xf32> to vector<18x16x128xf32>
    %21 = vector.extract_strided_slice %18 {offsets = [0, 2, 0], sizes = [18, 16, 128], strides = [1, 1, 1]} : vector<18x18x128xf32> to vector<18x16x128xf32>
    %c0_19 = arith.constant 0 : index
    %c0_20 = arith.constant 0 : index
    %22 = vector.load %arg5[%c0_19, %c0_20] : memref<9x128xf32, #tpu.memory_space<vmem>>, vector<1x128xf32>
    %23 = vector.shape_cast %22 : vector<1x128xf32> to vector<1x1x128xf32>
    %24 = vector.extract_strided_slice %19 {offsets = [0, 0, 0], sizes = [16, 16, 128], strides = [1, 1, 1]} : vector<18x16x128xf32> to vector<16x16x128xf32>
    %25 = vector.broadcast %23 : vector<1x1x128xf32> to vector<16x16x128xf32>
    %26 = arith.mulf %24, %25 : vector<16x16x128xf32>
    %27 = arith.addf %17, %26 : vector<16x16x128xf32>
    %c1_21 = arith.constant 1 : index
    %c0_22 = arith.constant 0 : index
    %28 = vector.load %arg5[%c1_21, %c0_22] : memref<9x128xf32, #tpu.memory_space<vmem>>, vector<1x128xf32>
    %29 = vector.shape_cast %28 : vector<1x128xf32> to vector<1x1x128xf32>
    %30 = vector.extract_strided_slice %20 {offsets = [0, 0, 0], sizes = [16, 16, 128], strides = [1, 1, 1]} : vector<18x16x128xf32> to vector<16x16x128xf32>
    %31 = vector.broadcast %29 : vector<1x1x128xf32> to vector<16x16x128xf32>
    %32 = arith.mulf %30, %31 : vector<16x16x128xf32>
    %33 = arith.addf %27, %32 : vector<16x16x128xf32>
    %c2 = arith.constant 2 : index
    %c0_23 = arith.constant 0 : index
    %34 = vector.load %arg5[%c2, %c0_23] : memref<9x128xf32, #tpu.memory_space<vmem>>, vector<1x128xf32>
    %35 = vector.shape_cast %34 : vector<1x128xf32> to vector<1x1x128xf32>
    %36 = vector.extract_strided_slice %21 {offsets = [0, 0, 0], sizes = [16, 16, 128], strides = [1, 1, 1]} : vector<18x16x128xf32> to vector<16x16x128xf32>
    %37 = vector.broadcast %35 : vector<1x1x128xf32> to vector<16x16x128xf32>
    %38 = arith.mulf %36, %37 : vector<16x16x128xf32>
    %39 = arith.addf %33, %38 : vector<16x16x128xf32>
    %c3 = arith.constant 3 : index
    %c0_24 = arith.constant 0 : index
    %40 = vector.load %arg5[%c3, %c0_24] : memref<9x128xf32, #tpu.memory_space<vmem>>, vector<1x128xf32>
    %41 = vector.shape_cast %40 : vector<1x128xf32> to vector<1x1x128xf32>
    %42 = vector.extract_strided_slice %19 {offsets = [1, 0, 0], sizes = [16, 16, 128], strides = [1, 1, 1]} : vector<18x16x128xf32> to vector<16x16x128xf32>
    %43 = vector.broadcast %41 : vector<1x1x128xf32> to vector<16x16x128xf32>
    %44 = arith.mulf %42, %43 : vector<16x16x128xf32>
    %45 = arith.addf %39, %44 : vector<16x16x128xf32>
    %c4 = arith.constant 4 : index
    %c0_25 = arith.constant 0 : index
    %46 = vector.load %arg5[%c4, %c0_25] : memref<9x128xf32, #tpu.memory_space<vmem>>, vector<1x128xf32>
    %47 = vector.shape_cast %46 : vector<1x128xf32> to vector<1x1x128xf32>
    %48 = vector.extract_strided_slice %20 {offsets = [1, 0, 0], sizes = [16, 16, 128], strides = [1, 1, 1]} : vector<18x16x128xf32> to vector<16x16x128xf32>
    %49 = vector.broadcast %47 : vector<1x1x128xf32> to vector<16x16x128xf32>
    %50 = arith.mulf %48, %49 : vector<16x16x128xf32>
    %51 = arith.addf %45, %50 : vector<16x16x128xf32>
    %c5 = arith.constant 5 : index
    %c0_26 = arith.constant 0 : index
    %52 = vector.load %arg5[%c5, %c0_26] : memref<9x128xf32, #tpu.memory_space<vmem>>, vector<1x128xf32>
    %53 = vector.shape_cast %52 : vector<1x128xf32> to vector<1x1x128xf32>
    %54 = vector.extract_strided_slice %21 {offsets = [1, 0, 0], sizes = [16, 16, 128], strides = [1, 1, 1]} : vector<18x16x128xf32> to vector<16x16x128xf32>
    %55 = vector.broadcast %53 : vector<1x1x128xf32> to vector<16x16x128xf32>
    %56 = arith.mulf %54, %55 : vector<16x16x128xf32>
    %57 = arith.addf %51, %56 : vector<16x16x128xf32>
    %c6 = arith.constant 6 : index
    %c0_27 = arith.constant 0 : index
    %58 = vector.load %arg5[%c6, %c0_27] : memref<9x128xf32, #tpu.memory_space<vmem>>, vector<1x128xf32>
    %59 = vector.shape_cast %58 : vector<1x128xf32> to vector<1x1x128xf32>
    %60 = vector.extract_strided_slice %19 {offsets = [2, 0, 0], sizes = [16, 16, 128], strides = [1, 1, 1]} : vector<18x16x128xf32> to vector<16x16x128xf32>
    %61 = vector.broadcast %59 : vector<1x1x128xf32> to vector<16x16x128xf32>
    %62 = arith.mulf %60, %61 : vector<16x16x128xf32>
    %63 = arith.addf %57, %62 : vector<16x16x128xf32>
    %c7 = arith.constant 7 : index
    %c0_28 = arith.constant 0 : index
    %64 = vector.load %arg5[%c7, %c0_28] : memref<9x128xf32, #tpu.memory_space<vmem>>, vector<1x128xf32>
    %65 = vector.shape_cast %64 : vector<1x128xf32> to vector<1x1x128xf32>
    %66 = vector.extract_strided_slice %20 {offsets = [2, 0, 0], sizes = [16, 16, 128], strides = [1, 1, 1]} : vector<18x16x128xf32> to vector<16x16x128xf32>
    %67 = vector.broadcast %65 : vector<1x1x128xf32> to vector<16x16x128xf32>
    %68 = arith.mulf %66, %67 : vector<16x16x128xf32>
    %69 = arith.addf %63, %68 : vector<16x16x128xf32>
    %c8 = arith.constant 8 : index
    %c0_29 = arith.constant 0 : index
    %70 = vector.load %arg5[%c8, %c0_29] : memref<9x128xf32, #tpu.memory_space<vmem>>, vector<1x128xf32>
    %71 = vector.shape_cast %70 : vector<1x128xf32> to vector<1x1x128xf32>
    %72 = vector.extract_strided_slice %21 {offsets = [2, 0, 0], sizes = [16, 16, 128], strides = [1, 1, 1]} : vector<18x16x128xf32> to vector<16x16x128xf32>
    %73 = vector.broadcast %71 : vector<1x1x128xf32> to vector<16x16x128xf32>
    %74 = arith.mulf %72, %73 : vector<16x16x128xf32>
    %75 = arith.addf %69, %74 : vector<16x16x128xf32>
    %76 = vector.shape_cast %75 : vector<16x16x128xf32> to vector<256x128xf32>
    %c0_30 = arith.constant 0 : index
    %c0_31 = arith.constant 0 : index
    %77 = vector.load %arg6[%c0_30, %c0_31] : memref<1x128xf32, #tpu.memory_space<vmem>>, vector<1x128xf32>
    %78 = vector.broadcast %77 : vector<1x128xf32> to vector<256x128xf32>
    %79 = arith.mulf %76, %78 : vector<256x128xf32>
    %c0_32 = arith.constant 0 : index
    %c0_33 = arith.constant 0 : index
    %80 = vector.load %arg7[%c0_32, %c0_33] : memref<1x128xf32, #tpu.memory_space<vmem>>, vector<1x128xf32>
    %81 = vector.broadcast %80 : vector<1x128xf32> to vector<256x128xf32>
    %82 = arith.addf %79, %81 : vector<256x128xf32>
    %cst_34 = arith.constant 0.000000e+00 : f32
    %cst_35 = arith.constant 6.000000e+00 : f32
    %83 = vector.broadcast %cst_34 : f32 to vector<256x128xf32>
    %84 = arith.maximumf %83, %82 : vector<256x128xf32>
    %85 = vector.broadcast %cst_35 : f32 to vector<256x128xf32>
    %86 = arith.minimumf %85, %84 : vector<256x128xf32>
    %c0_36 = arith.constant 0 : index
    %c0_37 = arith.constant 0 : index
    %87 = vector.load %arg8[%c0_36, %c0_37] : memref<128x128xf32, #tpu.memory_space<vmem>>, vector<128x128xf32>
    %cst_38 = arith.constant dense<0.000000e+00> : vector<256x128xf32>
    %88 = tpu.matmul %86, %87, %cst_38 {dimension_numbers = #tpu.dot_dimension_numbers<[1], [0], [0], [1], [0, 0, 1, 1], [], []>} : vector<256x128xf32>, vector<128x128xf32>, vector<256x128xf32> -> vector<256x128xf32>
    %c0_39 = arith.constant 0 : index
    %c0_40 = arith.constant 0 : index
    %89 = vector.load %arg9[%c0_39, %c0_40] : memref<1x128xf32, #tpu.memory_space<vmem>>, vector<1x128xf32>
    %90 = vector.broadcast %89 : vector<1x128xf32> to vector<256x128xf32>
    %91 = arith.mulf %88, %90 : vector<256x128xf32>
    %c0_41 = arith.constant 0 : index
    %c0_42 = arith.constant 0 : index
    %92 = vector.load %arg10[%c0_41, %c0_42] : memref<1x128xf32, #tpu.memory_space<vmem>>, vector<1x128xf32>
    %93 = vector.broadcast %92 : vector<1x128xf32> to vector<256x128xf32>
    %94 = arith.addf %91, %93 : vector<256x128xf32>
    %95 = arith.addf %94, %0 : vector<256x128xf32>
    %c0_43 = arith.constant 0 : index
    %c0_44 = arith.constant 0 : index
    %96 = vector.load %arg11[%c0_43, %c0_44] : memref<256x128xf32, #tpu.memory_space<vmem>>, vector<256x128xf32>
    tpu.vector_store %arg11[%c0_43, %c0_44], %95 {strides = array<i32>} : memref<256x128xf32, #tpu.memory_space<vmem>>, vector<256x128xf32>,
    return
  }
  func.func @transform_0(%arg0: i32) -> (i32, i32) {
    %c0_i32 = arith.constant 0 : i32
    %c0_i32_0 = arith.constant 0 : i32
    return %arg0, %c0_i32 : i32, i32
  }
  func.func @transform_1(%arg0: i32) -> (i32, i32) {
    %c0_i32 = arith.constant 0 : i32
    %c0_i32_0 = arith.constant 0 : i32
    %c0_i32_1 = arith.constant 0 : i32
    return %c0_i32, %c0_i32_0 : i32, i32
  }
  func.func @transform_2(%arg0: i32) -> (i32, i32) {
    %c0_i32 = arith.constant 0 : i32
    %c0_i32_0 = arith.constant 0 : i32
    %c0_i32_1 = arith.constant 0 : i32
    return %c0_i32, %c0_i32_0 : i32, i32
  }
  func.func @transform_3(%arg0: i32) -> (i32, i32) {
    %c0_i32 = arith.constant 0 : i32
    %c0_i32_0 = arith.constant 0 : i32
    %c0_i32_1 = arith.constant 0 : i32
    return %c0_i32, %c0_i32_0 : i32, i32
  }
  func.func @transform_4(%arg0: i32) -> (i32, i32) {
    %c0_i32 = arith.constant 0 : i32
    %c0_i32_0 = arith.constant 0 : i32
    %c0_i32_1 = arith.constant 0 : i32
    return %c0_i32, %c0_i32_0 : i32, i32
  }
  func.func @transform_5(%arg0: i32) -> (i32, i32) {
    %c0_i32 = arith.constant 0 : i32
    %c0_i32_0 = arith.constant 0 : i32
    %c0_i32_1 = arith.constant 0 : i32
    return %c0_i32, %c0_i32_0 : i32, i32
  }
  func.func @transform_6(%arg0: i32) -> (i32, i32) {
    %c0_i32 = arith.constant 0 : i32
    %c0_i32_0 = arith.constant 0 : i32
    %c0_i32_1 = arith.constant 0 : i32
    return %c0_i32, %c0_i32_0 : i32, i32
  }
  func.func @transform_7(%arg0: i32) -> (i32, i32) {
    %c0_i32 = arith.constant 0 : i32
    %c0_i32_0 = arith.constant 0 : i32
    %c0_i32_1 = arith.constant 0 : i32
    return %c0_i32, %c0_i32_0 : i32, i32
  }
  func.func @transform_8(%arg0: i32) -> (i32, i32) {
    %c0_i32 = arith.constant 0 : i32
    %c0_i32_0 = arith.constant 0 : i32
    %c0_i32_1 = arith.constant 0 : i32
    return %c0_i32, %c0_i32_0 : i32, i32
  }
  func.func @transform_9(%arg0: i32) -> (i32, i32) {
    %c0_i32 = arith.constant 0 : i32
    %c0_i32_0 = arith.constant 0 : i32
    %c0_i32_1 = arith.constant 0 : i32
    return %c0_i32, %c0_i32_0 : i32, i32
  }
  func.func @transform_10(%arg0: i32) -> (i32, i32) {
    %c0_i32 = arith.constant 0 : i32
    %c0_i32_0 = arith.constant 0 : i32
    return %arg0, %c0_i32 : i32, i32
  }
}

</mosaic_0001>

<llo_original>
// kernel: tpu_custom_call.1
$region0: #{tpu_custom_call.1}
  #allocation0 [shape = 'u32[]', space=smem, size = 0x4, offset = 0x4, fixed_abs, tag = 'smem constant byte address 0x4 - core index']
  #allocation1 [shape = 'u32[72,128]{1,0:T(1,128)}', space=vmem, size = 0x9000, scoped, tag = 'internal scratch']
  #allocation2 [shape = 'f32[18,18,128]{2,1,0:T(8,128)}', space=vmem, size = 0x36000, scoped, tag = 'scratch operand']
  %s0 = inlined_call_operand.hbm [shape: f32[512,128], index: 0, kind: input, shape index: {}]
  %s1 = inlined_call_operand.hbm [shape: f32[128,128], index: 1, kind: input, shape index: {}]
  %s2 = inlined_call_operand.vmem [shape: f32[1,128], index: 2, kind: input, shape index: {}]
  %s3 = inlined_call_operand.vmem [shape: f32[1,128], index: 3, kind: input, shape index: {}]
  %s4 = inlined_call_operand.hbm [shape: f32[9,128], index: 4, kind: input, shape index: {}]
  %s5 = inlined_call_operand.vmem [shape: f32[1,128], index: 5, kind: input, shape index: {}]
  %s6 = inlined_call_operand.vmem [shape: f32[1,128], index: 6, kind: input, shape index: {}]
  %s7 = inlined_call_operand.hbm [shape: f32[128,128], index: 7, kind: input, shape index: {}]
  %s8 = inlined_call_operand.vmem [shape: f32[1,128], index: 8, kind: input, shape index: {}]
  %s9 = inlined_call_operand.vmem [shape: f32[1,128], index: 9, kind: input, shape index: {}]
  %s10 = inlined_call_operand.hbm [shape: f32[512,128], index: 10, kind: output, shape index: {}]
  %s11 = sld [smem:[#allocation0]]
  $region89: #{tpu_custom_call.1} parent=0
    _
  %s13 = ssub.s32 1, %s11
  %s14 = scalar_select 0, %s13, %s11
  $region1: #{tpu_custom_call.1} parent=0
    #allocation3 [shape = 'u8[262144]{0}', space=vmem, size = 0x40000, scoped, tag = 'input window, operand 0']
    #allocation4 [shape = 's32[2]{0}', space=sflag, size = 0x8, scoped, tag = 'scoped memory for tpu_custom_call.1']
    #allocation5 [shape = 's32[2]{0}', space=sflag, size = 0x8, scoped, tag = 'scoped memory for tpu_custom_call.1']
    #allocation6 [shape = 'u8[65536]{0}', space=vmem, size = 0x10000, scoped, tag = 'input window, operand 1, single buffered']
    #allocation7 [shape = 's32[1]{0}', space=sflag, size = 0x4, scoped, tag = 'scoped memory for tpu_custom_call.1']
    #allocation8 [shape = 'u8[8192]{0}', space=vmem, size = 0x2000, scoped, tag = 'input window, operand 4, single buffered']
    #allocation9 [shape = 'u8[65536]{0}', space=vmem, size = 0x10000, scoped, tag = 'input window, operand 7, single buffered']
    #allocation10 [shape = 's32[1]{0}', space=sflag, size = 0x4, scoped, tag = 'scoped memory for tpu_custom_call.1']
    #allocation11 [shape = 'u8[262144]{0}', space=vmem, size = 0x40000, scoped, tag = 'output window, operand 0']
    %15 = vsyncpa [#allocation4], 0
    %s16 = scalar_lea.sflag [#allocation4], 1
    %17 = vsyncpa %s16, 0
    %18 = vsyncpa [#allocation7], 0
    %19 = vsyncpa [#allocation10], 0
    %20 = vsyncpa [#allocation5], 0
    %s21 = scalar_lea.sflag [#allocation5], 1
    %22 = vsyncpa %s21, 0
    loop: start=0, step=1, limit=4
    $region2: #{tpu_custom_call.1} parent=1 // loop_pre_header
      _
    $region3: #{tpu_custom_call.1} parent=1 // loop_header
      %s24 = sphi 0, %s28
      %p25 = scmp.ge.s32.totalorder %s24, 4
      %s34 = sphi 0, %s36
      %s37 = sphi 0, %s34
      %s38 = sphi 0, %s37
      %s54 = sphi 0, %s38
      %s58 = sphi 0, %s58
      %s60 = sphi 0, %s58
      %s61 = sphi 0, %s60
      %s75 = sphi 0, %s61
      %s79 = sphi 0, %s79
      %s81 = sphi 0, %s79
      %s82 = sphi 0, %s81
      %s96 = sphi 0, %s82
      %s100 = sphi 0, %s100
      %s102 = sphi 0, %s100
      %s103 = sphi 0, %s102
      %s117 = sphi 0, %s103
      %s121 = sphi 0, %s121
      %s123 = sphi 0, %s121
      %s124 = sphi 0, %s123
      %s138 = sphi 0, %s124
      %s142 = sphi 0, %s142
      %s144 = sphi 0, %s142
      %s145 = sphi 0, %s144
      %s159 = sphi 0, %s145
      %s163 = sphi 0, %s163
      %s165 = sphi 0, %s163
      %s166 = sphi 0, %s165
      %s180 = sphi 0, %s166
      %s184 = sphi 0, %s184
      %s186 = sphi 0, %s184
      %s187 = sphi 0, %s186
      %s201 = sphi 0, %s187
      %s205 = sphi 0, %s205
      %s207 = sphi 0, %s205
      %s208 = sphi 0, %s207
      %s222 = sphi 0, %s208
      %s226 = sphi 0, %s226
      %s228 = sphi 0, %s226
      %s229 = sphi 0, %s228
      %s243 = sphi 0, %s229
      %s249 = sphi 0, %s251
      %s252 = sphi 0, %s249
      %s253 = sphi 0, %s252
      %s269 = sphi 0, %s253
    $region4: #{tpu_custom_call.1} parent=1 // loop_header_branch
      %27 = sbr.rel (%p25) target = $region8
    $region5: #{tpu_custom_call.1} parent=1 // loop_body
      %s29 = ssub.s32 %s24, 1
      %s30 = ssub.s32 %s24, 2
      %s31 = sadd.s32 %s24, 1
      %s32 = ssub.s32 %s24, %s31
      %p33 = scmp.eq.s32.totalorder %s32, 0
      %s35 = sadd.s32 %s34, 1
      %s36 = scalar_select %p33, %s34, %s35
      %p39 = pneg %p33
      %p40 = scmp.eq.s32.totalorder %s24, 1
      %p41 = por %p39, %p40
      %p42 = scmp.ne.s32.totalorder %s34, %s37
      %p43 = scmp.eq.s32.totalorder %s24, 0
      %p44 = por %p42, %p43
      %p45 = scmp.ne.s32.totalorder %s34, %s37
      %p46 = scmp.eq.s32.totalorder %s29, 1
      %p47 = por %p45, %p46
      %p48 = scmp.ne.s32.totalorder %s37, %s38
      %p49 = scmp.eq.s32.totalorder %s29, 0
      %p50 = por %p48, %p49
      %p51 = scmp.ne.s32.totalorder %s37, %s38
      %p52 = scmp.eq.s32.totalorder %s30, 1
      %p53 = por %p51, %p52
      %p55 = scmp.ne.s32.totalorder %s38, %s54
      %p56 = scmp.eq.s32.totalorder %s30, 0
      %p57 = por %p55, %p56
      %s59 = sadd.s32 %s58, 1
      %p62 = scmp.eq.s32.totalorder %s24, 1
      %p63 = scmp.ne.s32.totalorder %s58, %s60
      %p64 = scmp.eq.s32.totalorder %s24, 0
      %p65 = por %p63, %p64
      %p66 = scmp.ne.s32.totalorder %s58, %s60
      %p67 = scmp.eq.s32.totalorder %s29, 1
      %p68 = por %p66, %p67
      %p69 = scmp.ne.s32.totalorder %s60, %s61
      %p70 = scmp.eq.s32.totalorder %s29, 0
      %p71 = por %p69, %p70
      %p72 = scmp.ne.s32.totalorder %s60, %s61
      %p73 = scmp.eq.s32.totalorder %s30, 1
      %p74 = por %p72, %p73
      %p76 = scmp.ne.s32.totalorder %s61, %s75
      %p77 = scmp.eq.s32.totalorder %s30, 0
      %p78 = por %p76, %p77
      %s80 = sadd.s32 %s79, 1
      %p83 = scmp.eq.s32.totalorder %s24, 1
      %p84 = scmp.ne.s32.totalorder %s79, %s81
      %p85 = scmp.eq.s32.totalorder %s24, 0
      %p86 = por %p84, %p85
      %p87 = scmp.ne.s32.totalorder %s79, %s81
      %p88 = scmp.eq.s32.totalorder %s29, 1
      %p89 = por %p87, %p88
      %p90 = scmp.ne.s32.totalorder %s81, %s82
      %p91 = scmp.eq.s32.totalorder %s29, 0
      %p92 = por %p90, %p91
      %p93 = scmp.ne.s32.totalorder %s81, %s82
      %p94 = scmp.eq.s32.totalorder %s30, 1
      %p95 = por %p93, %p94
      %p97 = scmp.ne.s32.totalorder %s82, %s96
      %p98 = scmp.eq.s32.totalorder %s30, 0
      %p99 = por %p97, %p98
      %s101 = sadd.s32 %s100, 1
      %p104 = scmp.eq.s32.totalorder %s24, 1
      %p105 = scmp.ne.s32.totalorder %s100, %s102
      %p106 = scmp.eq.s32.totalorder %s24, 0
      %p107 = por %p105, %p106
      %p108 = scmp.ne.s32.totalorder %s100, %s102
      %p109 = scmp.eq.s32.totalorder %s29, 1
      %p110 = por %p108, %p109
      %p111 = scmp.ne.s32.totalorder %s102, %s103
      %p112 = scmp.eq.s32.totalorder %s29, 0
      %p113 = por %p111, %p112
      %p114 = scmp.ne.s32.totalorder %s102, %s103
      %p115 = scmp.eq.s32.totalorder %s30, 1
      %p116 = por %p114, %p115
      %p118 = scmp.ne.s32.totalorder %s103, %s117
      %p119 = scmp.eq.s32.totalorder %s30, 0
      %p120 = por %p118, %p119
      %s122 = sadd.s32 %s121, 1
      %p125 = scmp.eq.s32.totalorder %s24, 1
      %p126 = scmp.ne.s32.totalorder %s121, %s123
      %p127 = scmp.eq.s32.totalorder %s24, 0
      %p128 = por %p126, %p127
      %p129 = scmp.ne.s32.totalorder %s121, %s123
      %p130 = scmp.eq.s32.totalorder %s29, 1
      %p131 = por %p129, %p130
      %p132 = scmp.ne.s32.totalorder %s123, %s124
      %p133 = scmp.eq.s32.totalorder %s29, 0
      %p134 = por %p132, %p133
      %p135 = scmp.ne.s32.totalorder %s123, %s124
      %p136 = scmp.eq.s32.totalorder %s30, 1
      %p137 = por %p135, %p136
      %p139 = scmp.ne.s32.totalorder %s124, %s138
      %p140 = scmp.eq.s32.totalorder %s30, 0
      %p141 = por %p139, %p140
      %s143 = sadd.s32 %s142, 1
      %p146 = scmp.eq.s32.totalorder %s24, 1
      %p147 = scmp.ne.s32.totalorder %s142, %s144
      %p148 = scmp.eq.s32.totalorder %s24, 0
      %p149 = por %p147, %p148
      %p150 = scmp.ne.s32.totalorder %s142, %s144
      %p151 = scmp.eq.s32.totalorder %s29, 1
      %p152 = por %p150, %p151
      %p153 = scmp.ne.s32.totalorder %s144, %s145
      %p154 = scmp.eq.s32.totalorder %s29, 0
      %p155 = por %p153, %p154
      %p156 = scmp.ne.s32.totalorder %s144, %s145
      %p157 = scmp.eq.s32.totalorder %s30, 1
      %p158 = por %p156, %p157
      %p160 = scmp.ne.s32.totalorder %s145, %s159
      %p161 = scmp.eq.s32.totalorder %s30, 0
      %p162 = por %p160, %p161
      %s164 = sadd.s32 %s163, 1
      %p167 = scmp.eq.s32.totalorder %s24, 1
      %p168 = scmp.ne.s32.totalorder %s163, %s165
      %p169 = scmp.eq.s32.totalorder %s24, 0
      %p170 = por %p168, %p169
      %p171 = scmp.ne.s32.totalorder %s163, %s165
      %p172 = scmp.eq.s32.totalorder %s29, 1
      %p173 = por %p171, %p172
      %p174 = scmp.ne.s32.totalorder %s165, %s166
      %p175 = scmp.eq.s32.totalorder %s29, 0
      %p176 = por %p174, %p175
      %p177 = scmp.ne.s32.totalorder %s165, %s166
      %p178 = scmp.eq.s32.totalorder %s30, 1
      %p179 = por %p177, %p178
      %p181 = scmp.ne.s32.totalorder %s166, %s180
      %p182 = scmp.eq.s32.totalorder %s30, 0
      %p183 = por %p181, %p182
      %s185 = sadd.s32 %s184, 1
      %p188 = scmp.eq.s32.totalorder %s24, 1
      %p189 = scmp.ne.s32.totalorder %s184, %s186
      %p190 = scmp.eq.s32.totalorder %s24, 0
      %p191 = por %p189, %p190
      %p192 = scmp.ne.s32.totalorder %s184, %s186
      %p193 = scmp.eq.s32.totalorder %s29, 1
      %p194 = por %p192, %p193
      %p195 = scmp.ne.s32.totalorder %s186, %s187
      %p196 = scmp.eq.s32.totalorder %s29, 0
      %p197 = por %p195, %p196
      %p198 = scmp.ne.s32.totalorder %s186, %s187
      %p199 = scmp.eq.s32.totalorder %s30, 1
      %p200 = por %p198, %p199
      %p202 = scmp.ne.s32.totalorder %s187, %s201
      %p203 = scmp.eq.s32.totalorder %s30, 0
      %p204 = por %p202, %p203
      %s206 = sadd.s32 %s205, 1
      %p209 = scmp.eq.s32.totalorder %s24, 1
      %p210 = scmp.ne.s32.totalorder %s205, %s207
      %p211 = scmp.eq.s32.totalorder %s24, 0
      %p212 = por %p210, %p211
      %p213 = scmp.ne.s32.totalorder %s205, %s207
      %p214 = scmp.eq.s32.totalorder %s29, 1
      %p215 = por %p213, %p214
      %p216 = scmp.ne.s32.totalorder %s207, %s208
      %p217 = scmp.eq.s32.totalorder %s29, 0
      %p218 = por %p216, %p217
      %p219 = scmp.ne.s32.totalorder %s207, %s208
      %p220 = scmp.eq.s32.totalorder %s30, 1
      %p221 = por %p219, %p220
      %p223 = scmp.ne.s32.totalorder %s208, %s222
      %p224 = scmp.eq.s32.totalorder %s30, 0
      %p225 = por %p223, %p224
      %s227 = sadd.s32 %s226, 1
      %p230 = scmp.eq.s32.totalorder %s24, 1
      %p231 = scmp.ne.s32.totalorder %s226, %s228
      %p232 = scmp.eq.s32.totalorder %s24, 0
      %p233 = por %p231, %p232
      %p234 = scmp.ne.s32.totalorder %s226, %s228
      %p235 = scmp.eq.s32.totalorder %s29, 1
      %p236 = por %p234, %p235
      %p237 = scmp.ne.s32.totalorder %s228, %s229
      %p238 = scmp.eq.s32.totalorder %s29, 0
      %p239 = por %p237, %p238
      %p240 = scmp.ne.s32.totalorder %s228, %s229
      %p241 = scmp.eq.s32.totalorder %s30, 1
      %p242 = por %p240, %p241
      %p244 = scmp.ne.s32.totalorder %s229, %s243
      %p245 = scmp.eq.s32.totalorder %s30, 0
      %p246 = por %p244, %p245
      %s247 = ssub.s32 %s24, %s31
      %p248 = scmp.eq.s32.totalorder %s247, 0
      %s250 = sadd.s32 %s249, 1
      %s251 = scalar_select %p248, %s249, %s250
      %p254 = pneg %p248
      %p255 = scmp.eq.s32.totalorder %s24, 1
      %p256 = por %p254, %p255
      %p257 = scmp.ne.s32.totalorder %s249, %s252
      %p258 = scmp.eq.s32.totalorder %s24, 0
      %p259 = por %p257, %p258
      %p260 = scmp.ne.s32.totalorder %s249, %s252
      %p261 = scmp.eq.s32.totalorder %s29, 1
      %p262 = por %p260, %p261
      %p263 = scmp.ne.s32.totalorder %s252, %s253
      %p264 = scmp.eq.s32.totalorder %s29, 0
      %p265 = por %p263, %p264
      %p266 = scmp.ne.s32.totalorder %s252, %s253
      %p267 = scmp.eq.s32.totalorder %s30, 1
      %p268 = por %p266, %p267
      %p270 = scmp.ne.s32.totalorder %s253, %s269
      %p271 = scmp.eq.s32.totalorder %s30, 0
      %p272 = por %p270, %p271
      %p273 = scmp.le.s32.totalorder 1, %s24
      %p274 = scmp.lt.s32.totalorder %s24, 3
      %p275 = pnand %p273, %p274
      %p276 = pneg %p275
      // Predicated region
      $region9: #{tpu_custom_call.1} parent=5 // pred_check
        _
      $region10: #{tpu_custom_call.1} parent=5 // pred_check_branch
        %278 = sbr.rel (%p275) target = $region12
      $region11: #{tpu_custom_call.1} parent=5 // pred_region
        %s279 = ssub.s32 %s24, 1
        // Predicated region
        $region13: #{tpu_custom_call.1} parent=11 // pred_check
          %p280 = pneg %p71
        $region14: #{tpu_custom_call.1} parent=11 // pred_check_branch
          %282 = sbr.rel (%p280) target = $region16
        $region15: #{tpu_custom_call.1} parent=11 // pred_region
          %284 = vsyncadd [#allocation7], 0
          %s285 = sshll.u32 %s1, 4
          %s286 = int_to_ptr.hbm [resolvable:$true] %s285
          %s287 = sshll.u32 [#allocation6], 4
          %s288 = int_to_ptr.vmem [resolvable:$true] %s287
          %293 = dma.hbm_to_vmem [thread:$0]  %s286, 2048, %s288, [#allocation7], 128, 128, 8
        $region16: #{tpu_custom_call.1} parent=11 // pred_fallthru
          _
        // Predicated region
        $region17: #{tpu_custom_call.1} parent=11 // pred_check
          %p294 = pneg %p92
        $region18: #{tpu_custom_call.1} parent=11 // pred_check_branch
          %296 = sbr.rel (%p294) target = $region20
        $region19: #{tpu_custom_call.1} parent=11 // pred_region
          _
        $region20: #{tpu_custom_call.1} parent=11 // pred_fallthru
          _
        // Predicated region
        $region21: #{tpu_custom_call.1} parent=11 // pred_check
          %p297 = pneg %p113
        $region22: #{tpu_custom_call.1} parent=11 // pred_check_branch
          %299 = sbr.rel (%p297) target = $region24
        $region23: #{tpu_custom_call.1} parent=11 // pred_region
          _
        $region24: #{tpu_custom_call.1} parent=11 // pred_fallthru
          _
        // Predicated region
        $region25: #{tpu_custom_call.1} parent=11 // pred_check
          %p300 = pneg %p134
        $region26: #{tpu_custom_call.1} parent=11 // pred_check_branch
          %302 = sbr.rel (%p300) target = $region28
        $region27: #{tpu_custom_call.1} parent=11 // pred_region
          %304 = vsyncadd [#allocation7], 0
          %s305 = sshll.u32 %s4, 4
          %s306 = int_to_ptr.hbm [resolvable:$true] %s305
          %s307 = sshll.u32 [#allocation8], 4
          %s308 = int_to_ptr.vmem [resolvable:$true] %s307
          %313 = dma.hbm_to_vmem [thread:$0]  %s306, 256, %s308, [#allocation7], 128, 128, 8
        $region28: #{tpu_custom_call.1} parent=11 // pred_fallthru
          _
        // Predicated region
        $region29: #{tpu_custom_call.1} parent=11 // pred_check
          %p314 = pneg %p155
        $region30: #{tpu_custom_call.1} parent=11 // pred_check_branch
          %316 = sbr.rel (%p314) target = $region32
        $region31: #{tpu_custom_call.1} parent=11 // pred_region
          _
        $region32: #{tpu_custom_call.1} parent=11 // pred_fallthru
          _
        // Predicated region
        $region33: #{tpu_custom_call.1} parent=11 // pred_check
          %p317 = pneg %p176
        $region34: #{tpu_custom_call.1} parent=11 // pred_check_branch
          %319 = sbr.rel (%p317) target = $region36
        $region35: #{tpu_custom_call.1} parent=11 // pred_region
          _
        $region36: #{tpu_custom_call.1} parent=11 // pred_fallthru
          _
        // Predicated region
        $region37: #{tpu_custom_call.1} parent=11 // pred_check
          %p320 = pneg %p197
        $region38: #{tpu_custom_call.1} parent=11 // pred_check_branch
          %322 = sbr.rel (%p320) target = $region40
        $region39: #{tpu_custom_call.1} parent=11 // pred_region
          %324 = vsyncadd [#allocation10], 0
          %s325 = sshll.u32 %s7, 4
          %s326 = int_to_ptr.hbm [resolvable:$true] %s325
          %s327 = sshll.u32 [#allocation9], 4
          %s328 = int_to_ptr.vmem [resolvable:$true] %s327
          %333 = dma.hbm_to_vmem [thread:$0]  %s326, 2048, %s328, [#allocation10], 128, 128, 8
        $region40: #{tpu_custom_call.1} parent=11 // pred_fallthru
          _
        // Predicated region
        $region41: #{tpu_custom_call.1} parent=11 // pred_check
          %p334 = pneg %p218
        $region42: #{tpu_custom_call.1} parent=11 // pred_check_branch
          %336 = sbr.rel (%p334) target = $region44
        $region43: #{tpu_custom_call.1} parent=11 // pred_region
          _
        $region44: #{tpu_custom_call.1} parent=11 // pred_fallthru
          _
        // Predicated region
        $region45: #{tpu_custom_call.1} parent=11 // pred_check
          %p337 = pneg %p239
        $region46: #{tpu_custom_call.1} parent=11 // pred_check_branch
          %339 = sbr.rel (%p337) target = $region48
        $region47: #{tpu_custom_call.1} parent=11 // pred_region
          _
        $region48: #{tpu_custom_call.1} parent=11 // pred_fallthru
          _
      $region12: #{tpu_custom_call.1} parent=5 // pred_fallthru
        _
      %p340 = scmp.lt.s32.totalorder %s24, 2
      // Predicated region
      $region49: #{tpu_custom_call.1} parent=5 // pred_check
        %p341 = pneg %p340
      $region50: #{tpu_custom_call.1} parent=5 // pred_check_branch
        %343 = sbr.rel (%p341) target = $region52
      $region51: #{tpu_custom_call.1} parent=5 // pred_region
        // Predicated region
        $region53: #{tpu_custom_call.1} parent=51 // pred_check
          %p344 = pneg %p44
        $region54: #{tpu_custom_call.1} parent=51 // pred_check_branch
          %346 = sbr.rel (%p344) target = $region56
        $region55: #{tpu_custom_call.1} parent=51 // pred_region
          %s347 = sand.u32 %s34, 1
          %s348 = scalar_lea.sflag [#allocation4], %s347
          %s349 = sand.u32 %s34, 1
          %s350 = smul.addr %s349, 256
          %s351 = scalar_lea.vmem [#allocation3], %s350
          %s352 = smul.u32 32, %s24
          %354 = vsyncadd %s348, 0
          %s355 = smul.addr %s352, 8
          %s356 = scalar_lea.hbm %s0, %s355
          %s357 = sshll.u32 %s356, 4
          %s358 = int_to_ptr.hbm [resolvable:$true] %s357
          %s359 = sshll.u32 %s351, 4
          %s360 = int_to_ptr.vmem [resolvable:$true] %s359
          %365 = dma.hbm_to_vmem [thread:$0]  %s358, 4096, %s360, %s348, 128, 128, 8
        $region56: #{tpu_custom_call.1} parent=51 // pred_fallthru
          _
      $region52: #{tpu_custom_call.1} parent=5 // pred_fallthru
        _
      %p366 = scmp.le.s32.totalorder 1, %s24
      %p367 = scmp.lt.s32.totalorder %s24, 3
      %p368 = pnand %p366, %p367
      %p369 = pneg %p368
      // Predicated region
      $region57: #{tpu_custom_call.1} parent=5 // pred_check
        _
      $region58: #{tpu_custom_call.1} parent=5 // pred_check_branch
        %371 = sbr.rel (%p368) target = $region60
      $region59: #{tpu_custom_call.1} parent=5 // pred_region
        %s372 = ssub.s32 %s24, 1
        %s373 = sand.u32 %s37, 1
        %s374 = scalar_lea.sflag [#allocation4], %s373
        %s375 = sand.u32 %s37, 1
        %s376 = smul.addr %s375, 256
        %s377 = scalar_lea.vmem [#allocation3], %s376
        // Predicated region
        $region61: #{tpu_custom_call.1} parent=59 // pred_check
          %p378 = pneg %p50
        $region62: #{tpu_custom_call.1} parent=59 // pred_check_branch
          %380 = sbr.rel (%p378) target = $region64
        $region63: #{tpu_custom_call.1} parent=59 // pred_region
          %382 = dma.done %s374, 4096
        $region64: #{tpu_custom_call.1} parent=59 // pred_fallthru
          _
        // Predicated region
        $region65: #{tpu_custom_call.1} parent=59 // pred_check
          %p383 = pneg %p71
        $region66: #{tpu_custom_call.1} parent=59 // pred_check_branch
          %385 = sbr.rel (%p383) target = $region68
        $region67: #{tpu_custom_call.1} parent=59 // pred_region
          %387 = dma.done [#allocation7], 2048
        $region68: #{tpu_custom_call.1} parent=59 // pred_fallthru
          _
        // Predicated region
        $region69: #{tpu_custom_call.1} parent=59 // pred_check
          %p388 = pneg %p134
        $region70: #{tpu_custom_call.1} parent=59 // pred_check_branch
          %390 = sbr.rel (%p388) target = $region72
        $region71: #{tpu_custom_call.1} parent=59 // pred_region
          %392 = dma.done [#allocation7], 256
        $region72: #{tpu_custom_call.1} parent=59 // pred_fallthru
          _
        // Predicated region
        $region73: #{tpu_custom_call.1} parent=59 // pred_check
          %p393 = pneg %p197
        $region74: #{tpu_custom_call.1} parent=59 // pred_check_branch
          %395 = sbr.rel (%p393) target = $region76
        $region75: #{tpu_custom_call.1} parent=59 // pred_region
          %397 = dma.done [#allocation10], 2048
        $region76: #{tpu_custom_call.1} parent=59 // pred_fallthru
          _
        %s398 = sand.u32 %s37, 1
        %s399 = scalar_lea.sflag [#allocation4], %s398
        %s400 = sand.u32 %s37, 1
        %s401 = smul.addr %s400, 256
        %s402 = scalar_lea.vmem [#allocation3], %s401
        %p403 = pneg %p50
        %p404 = pneg %p47
        %p405 = pneg %p71
        %p406 = pneg %p68
        %p407 = pneg %p92
        %p408 = pneg %p89
        %p409 = pneg %p113
        %p410 = pneg %p110
        %p411 = pneg %p134
        %p412 = pneg %p131
        %p413 = pneg %p155
        %p414 = pneg %p152
        %p415 = pneg %p176
        %p416 = pneg %p173
        %p417 = pneg %p197
        %p418 = pneg %p194
        %p419 = pneg %p218
        %p420 = pneg %p215
        %p421 = pneg %p239
        %p422 = pneg %p236
        %p423 = pneg %p265
        %p424 = pneg %p262
        %s425 = sand.u32 %s252, 1
        %s426 = scalar_lea.sflag [#allocation5], %s425
        %s427 = sand.u32 %s252, 1
        %s428 = smul.addr %s427, 256
        %s429 = scalar_lea.vmem [#allocation11], %s428
        %s430 = smul.u32 32, %s29
        %s431 = smul.u32 32, %s29
        %v432 = vld [vmem:[%s377] sm:$0xff]
        %v433 = vld [vmem:[%s377 + $0x8] sm:$0xff]
        %v434 = vld [vmem:[%s377 + $0x10] sm:$0xff]
        %v435 = vld [vmem:[%s377 + $0x18] sm:$0xff]
        %v436 = vld [vmem:[%s377 + $0x20] sm:$0xff]
        %v437 = vld [vmem:[%s377 + $0x28] sm:$0xff]
        %v438 = vld [vmem:[%s377 + $0x30] sm:$0xff]
        %v439 = vld [vmem:[%s377 + $0x38] sm:$0xff]
        %v440 = vld [vmem:[%s377 + $0x40] sm:$0xff]
        %v441 = vld [vmem:[%s377 + $0x48] sm:$0xff]
        %v442 = vld [vmem:[%s377 + $0x50] sm:$0xff]
        %v443 = vld [vmem:[%s377 + $0x58] sm:$0xff]
        %v444 = vld [vmem:[%s377 + $0x60] sm:$0xff]
        %v445 = vld [vmem:[%s377 + $0x68] sm:$0xff]
        %v446 = vld [vmem:[%s377 + $0x70] sm:$0xff]
        %v447 = vld [vmem:[%s377 + $0x78] sm:$0xff]
        %v448 = vld [vmem:[%s377 + $0x80] sm:$0xff]
        %v449 = vld [vmem:[%s377 + $0x88] sm:$0xff]
        %v450 = vld [vmem:[%s377 + $0x90] sm:$0xff]
        %v451 = vld [vmem:[%s377 + $0x98] sm:$0xff]
        %v452 = vld [vmem:[%s377 + $0xa0] sm:$0xff]
        %v453 = vld [vmem:[%s377 + $0xa8] sm:$0xff]
        %v454 = vld [vmem:[%s377 + $0xb0] sm:$0xff]
        %v455 = vld [vmem:[%s377 + $0xb8] sm:$0xff]
        %v456 = vld [vmem:[%s377 + $0xc0] sm:$0xff]
        %v457 = vld [vmem:[%s377 + $0xc8] sm:$0xff]
        %v458 = vld [vmem:[%s377 + $0xd0] sm:$0xff]
        %v459 = vld [vmem:[%s377 + $0xd8] sm:$0xff]
        %v460 = vld [vmem:[%s377 + $0xe0] sm:$0xff]
        %v461 = vld [vmem:[%s377 + $0xe8] sm:$0xff]
        %v462 = vld [vmem:[%s377 + $0xf0] sm:$0xff]
        %v463 = vld [vmem:[%s377 + $0xf8] sm:$0xff]
        %v464 = vld [vmem:[#allocation6] sm:$0xff]
        %v465 = vld [vmem:[#allocation6 + $0x8] sm:$0xff]
        %v466 = vld [vmem:[#allocation6 + $0x10] sm:$0xff]
        %v467 = vld [vmem:[#allocation6 + $0x18] sm:$0xff]
        %v468 = vld [vmem:[#allocation6 + $0x20] sm:$0xff]
        %v469 = vld [vmem:[#allocation6 + $0x28] sm:$0xff]
        %v470 = vld [vmem:[#allocation6 + $0x30] sm:$0xff]
        %v471 = vld [vmem:[#allocation6 + $0x38] sm:$0xff]
        %v472 = vld [vmem:[#allocation6 + $0x40] sm:$0xff]
        %v473 = vld [vmem:[#allocation6 + $0x48] sm:$0xff]
        %v474 = vld [vmem:[#allocation6 + $0x50] sm:$0xff]
        %v475 = vld [vmem:[#allocation6 + $0x58] sm:$0xff]
        %v476 = vld [vmem:[#allocation6 + $0x60] sm:$0xff]
        %v477 = vld [vmem:[#allocation6 + $0x68] sm:$0xff]
        %v478 = vld [vmem:[#allocation6 + $0x70] sm:$0xff]
        %v479 = vld [vmem:[#allocation6 + $0x78] sm:$0xff]
        %480 = vmatpush.msra.mxu0 %v479
        %481 = vmatpush.msra.mxu0 %v478
        %482 = vmatpush.msra.mxu0 %v477
        %483 = vmatpush.msra.mxu0 %v476
        %484 = vmatpush.msra.mxu0 %v475
        %485 = vmatpush.msra.mxu0 %v474
        %486 = vmatpush.msra.mxu0 %v473
        %487 = vmatpush.msra.mxu0 %v472
        %488 = vmatpush.msra.mxu0 %v471
        %489 = vmatpush.msra.mxu0 %v470
        %490 = vmatpush.msra.mxu0 %v469
        %491 = vmatpush.msra.mxu0 %v468
        %492 = vmatpush.msra.mxu0 %v467
        %493 = vmatpush.msra.mxu0 %v466
        %494 = vmatpush.msra.mxu0 %v465
        %495 = vmatpush.msra.mxu0 %v464
        %496 = vmatmul.f32.gmra.mxu0 %v432
        %v497 = vpop.f32.mrf.mxu0
        %v498 = vadd.f32 0.0, %v497
        %499 = vmatmul.f32.gmra.mxu0 %v433
        %v500 = vpop.f32.mrf.mxu0
        %v501 = vadd.f32 0.0, %v500
        %502 = vmatmul.f32.gmra.mxu0 %v434
        %v503 = vpop.f32.mrf.mxu0
        %v504 = vadd.f32 0.0, %v503
        %505 = vmatmul.f32.gmra.mxu0 %v435
        %v506 = vpop.f32.mrf.mxu0
        %v507 = vadd.f32 0.0, %v506
        %508 = vmatmul.f32.gmra.mxu0 %v436
        %v509 = vpop.f32.mrf.mxu0
        %v510 = vadd.f32 0.0, %v509
        %511 = vmatmul.f32.gmra.mxu0 %v437
        %v512 = vpop.f32.mrf.mxu0
        %v513 = vadd.f32 0.0, %v512
        %514 = vmatmul.f32.gmra.mxu0 %v438
        %v515 = vpop.f32.mrf.mxu0
        %v516 = vadd.f32 0.0, %v515
        %517 = vmatmul.f32.gmra.mxu0 %v439
        %v518 = vpop.f32.mrf.mxu0
        %v519 = vadd.f32 0.0, %v518
        %520 = vmatmul.f32.gmra.mxu0 %v440
        %v521 = vpop.f32.mrf.mxu0
        %v522 = vadd.f32 0.0, %v521
        %523 = vmatmul.f32.gmra.mxu0 %v441
        %v524 = vpop.f32.mrf.mxu0
        %v525 = vadd.f32 0.0, %v524
        %526 = vmatmul.f32.gmra.mxu0 %v442
        %v527 = vpop.f32.mrf.mxu0
        %v528 = vadd.f32 0.0, %v527
        %529 = vmatmul.f32.gmra.mxu0 %v443
        %v530 = vpop.f32.mrf.mxu0
        %v531 = vadd.f32 0.0, %v530
        %532 = vmatmul.f32.gmra.mxu0 %v444
        %v533 = vpop.f32.mrf.mxu0
        %v534 = vadd.f32 0.0, %v533
        %535 = vmatmul.f32.gmra.mxu0 %v445
        %v536 = vpop.f32.mrf.mxu0
        %v537 = vadd.f32 0.0, %v536
        %538 = vmatmul.f32.gmra.mxu0 %v446
        %v539 = vpop.f32.mrf.mxu0
        %v540 = vadd.f32 0.0, %v539
        %541 = vmatmul.f32.gmra.mxu0 %v447
        %v542 = vpop.f32.mrf.mxu0
        %v543 = vadd.f32 0.0, %v542
        %544 = vmatmul.f32.gmra.mxu0 %v448
        %v545 = vpop.f32.mrf.mxu0
        %v546 = vadd.f32 0.0, %v545
        %547 = vmatmul.f32.gmra.mxu0 %v449
        %v548 = vpop.f32.mrf.mxu0
        %v549 = vadd.f32 0.0, %v548
        %550 = vmatmul.f32.gmra.mxu0 %v450
        %v551 = vpop.f32.mrf.mxu0
        %v552 = vadd.f32 0.0, %v551
        %553 = vmatmul.f32.gmra.mxu0 %v451
        %v554 = vpop.f32.mrf.mxu0
        %v555 = vadd.f32 0.0, %v554
        %556 = vmatmul.f32.gmra.mxu0 %v452
        %v557 = vpop.f32.mrf.mxu0
        %v558 = vadd.f32 0.0, %v557
        %559 = vmatmul.f32.gmra.mxu0 %v453
        %v560 = vpop.f32.mrf.mxu0
        %v561 = vadd.f32 0.0, %v560
        %562 = vmatmul.f32.gmra.mxu0 %v454
        %v563 = vpop.f32.mrf.mxu0
        %v564 = vadd.f32 0.0, %v563
        %565 = vmatmul.f32.gmra.mxu0 %v455
        %v566 = vpop.f32.mrf.mxu0
        %v567 = vadd.f32 0.0, %v566
        %568 = vmatmul.f32.gmra.mxu0 %v456
        %v569 = vpop.f32.mrf.mxu0
        %v570 = vadd.f32 0.0, %v569
        %571 = vmatmul.f32.gmra.mxu0 %v457
        %v572 = vpop.f32.mrf.mxu0
        %v573 = vadd.f32 0.0, %v572
        %574 = vmatmul.f32.gmra.mxu0 %v458
        %v575 = vpop.f32.mrf.mxu0
        %v576 = vadd.f32 0.0, %v575
        %577 = vmatmul.f32.gmra.mxu0 %v459
        %v578 = vpop.f32.mrf.mxu0
        %v579 = vadd.f32 0.0, %v578
        %580 = vmatmul.f32.gmra.mxu0 %v460
        %v581 = vpop.f32.mrf.mxu0
        %v582 = vadd.f32 0.0, %v581
        %583 = vmatmul.f32.gmra.mxu0 %v461
        %v584 = vpop.f32.mrf.mxu0
        %v585 = vadd.f32 0.0, %v584
        %586 = vmatmul.f32.gmra.mxu0 %v462
        %v587 = vpop.f32.mrf.mxu0
        %v588 = vadd.f32 0.0, %v587
        %589 = vmatmul.f32.gmra.mxu0 %v463
        %v590 = vpop.f32.mrf.mxu0
        %v591 = vadd.f32 0.0, %v590
        %592 = vdwg.mxu0
        %v593 = vld [vmem:[%s2] sm:$0x1]
        %v595 = vperm.slane %v593, 0
        %v597 = vmul.f32 %v498, %v595
        %v598 = vmul.f32 %v501, %v595
        %v599 = vmul.f32 %v504, %v595
        %v600 = vmul.f32 %v507, %v595
        %v601 = vmul.f32 %v510, %v595
        %v602 = vmul.f32 %v513, %v595
        %v603 = vmul.f32 %v516, %v595
        %v604 = vmul.f32 %v519, %v595
        %v605 = vmul.f32 %v522, %v595
        %v606 = vmul.f32 %v525, %v595
        %v607 = vmul.f32 %v528, %v595
        %v608 = vmul.f32 %v531, %v595
        %v609 = vmul.f32 %v534, %v595
        %v610 = vmul.f32 %v537, %v595
        %v611 = vmul.f32 %v540, %v595
        %v612 = vmul.f32 %v543, %v595
        %v613 = vmul.f32 %v546, %v595
        %v614 = vmul.f32 %v549, %v595
        %v615 = vmul.f32 %v552, %v595
        %v616 = vmul.f32 %v555, %v595
        %v617 = vmul.f32 %v558, %v595
        %v618 = vmul.f32 %v561, %v595
        %v619 = vmul.f32 %v564, %v595
        %v620 = vmul.f32 %v567, %v595
        %v621 = vmul.f32 %v570, %v595
        %v622 = vmul.f32 %v573, %v595
        %v623 = vmul.f32 %v576, %v595
        %v624 = vmul.f32 %v579, %v595
        %v625 = vmul.f32 %v582, %v595
        %v626 = vmul.f32 %v585, %v595
        %v627 = vmul.f32 %v588, %v595
        %v628 = vmul.f32 %v591, %v595
        %v629 = vld [vmem:[%s3] sm:$0x1]
        %v631 = vperm.slane %v629, 0
        %v633 = vadd.f32 %v597, %v631
        %v634 = vadd.f32 %v598, %v631
        %v635 = vadd.f32 %v599, %v631
        %v636 = vadd.f32 %v600, %v631
        %v637 = vadd.f32 %v601, %v631
        %v638 = vadd.f32 %v602, %v631
        %v639 = vadd.f32 %v603, %v631
        %v640 = vadd.f32 %v604, %v631
        %v641 = vadd.f32 %v605, %v631
        %v642 = vadd.f32 %v606, %v631
        %v643 = vadd.f32 %v607, %v631
        %v644 = vadd.f32 %v608, %v631
        %v645 = vadd.f32 %v609, %v631
        %v646 = vadd.f32 %v610, %v631
        %v647 = vadd.f32 %v611, %v631
        %v648 = vadd.f32 %v612, %v631
        %v649 = vadd.f32 %v613, %v631
        %v650 = vadd.f32 %v614, %v631
        %v651 = vadd.f32 %v615, %v631
        %v652 = vadd.f32 %v616, %v631
        %v653 = vadd.f32 %v617, %v631
        %v654 = vadd.f32 %v618, %v631
        %v655 = vadd.f32 %v619, %v631
        %v656 = vadd.f32 %v620, %v631
        %v657 = vadd.f32 %v621, %v631
        %v658 = vadd.f32 %v622, %v631
        %v659 = vadd.f32 %v623, %v631
        %v660 = vadd.f32 %v624, %v631
        %v661 = vadd.f32 %v625, %v631
        %v662 = vadd.f32 %v626, %v631
        %v663 = vadd.f32 %v627, %v631
        %v664 = vadd.f32 %v628, %v631
        %v665 = vmax.f32 %v633, 0.0
        %v666 = vmax.f32 %v634, 0.0
        %v667 = vmax.f32 %v635, 0.0
        %v668 = vmax.f32 %v636, 0.0
        %v669 = vmax.f32 %v637, 0.0
        %v670 = vmax.f32 %v638, 0.0
        %v671 = vmax.f32 %v639, 0.0
        %v672 = vmax.f32 %v640, 0.0
        %v673 = vmax.f32 %v641, 0.0
        %v674 = vmax.f32 %v642, 0.0
        %v675 = vmax.f32 %v643, 0.0
        %v676 = vmax.f32 %v644, 0.0
        %v677 = vmax.f32 %v645, 0.0
        %v678 = vmax.f32 %v646, 0.0
        %v679 = vmax.f32 %v647, 0.0
        %v680 = vmax.f32 %v648, 0.0
        %v681 = vmax.f32 %v649, 0.0
        %v682 = vmax.f32 %v650, 0.0
        %v683 = vmax.f32 %v651, 0.0
        %v684 = vmax.f32 %v652, 0.0
        %v685 = vmax.f32 %v653, 0.0
        %v686 = vmax.f32 %v654, 0.0
        %v687 = vmax.f32 %v655, 0.0
        %v688 = vmax.f32 %v656, 0.0
        %v689 = vmax.f32 %v657, 0.0
        %v690 = vmax.f32 %v658, 0.0
        %v691 = vmax.f32 %v659, 0.0
        %v692 = vmax.f32 %v660, 0.0
        %v693 = vmax.f32 %v661, 0.0
        %v694 = vmax.f32 %v662, 0.0
        %v695 = vmax.f32 %v663, 0.0
        %v696 = vmax.f32 %v664, 0.0
        %v697 = vmin.f32 %v665, 6.0
        %v698 = vmin.f32 %v666, 6.0
        %v699 = vmin.f32 %v667, 6.0
        %v700 = vmin.f32 %v668, 6.0
        %v701 = vmin.f32 %v669, 6.0
        %v702 = vmin.f32 %v670, 6.0
        %v703 = vmin.f32 %v671, 6.0
        %v704 = vmin.f32 %v672, 6.0
        %v705 = vmin.f32 %v673, 6.0
        %v706 = vmin.f32 %v674, 6.0
        %v707 = vmin.f32 %v675, 6.0
        %v708 = vmin.f32 %v676, 6.0
        %v709 = vmin.f32 %v677, 6.0
        %v710 = vmin.f32 %v678, 6.0
        %v711 = vmin.f32 %v679, 6.0
        %v712 = vmin.f32 %v680, 6.0
        %v713 = vmin.f32 %v681, 6.0
        %v714 = vmin.f32 %v682, 6.0
        %v715 = vmin.f32 %v683, 6.0
        %v716 = vmin.f32 %v684, 6.0
        %v717 = vmin.f32 %v685, 6.0
        %v718 = vmin.f32 %v686, 6.0
        %v719 = vmin.f32 %v687, 6.0
        %v720 = vmin.f32 %v688, 6.0
        %v721 = vmin.f32 %v689, 6.0
        %v722 = vmin.f32 %v690, 6.0
        %v723 = vmin.f32 %v691, 6.0
        %v724 = vmin.f32 %v692, 6.0
        %v725 = vmin.f32 %v693, 6.0
        %v726 = vmin.f32 %v694, 6.0
        %v727 = vmin.f32 %v695, 6.0
        %v728 = vmin.f32 %v696, 6.0
        %729 = vst [vmem:[#allocation2] sm:$0xff] 0.0
        %730 = vst [vmem:[#allocation2 + $0x8] sm:$0xff] 0.0
        %731 = vst [vmem:[#allocation2 + $0x10] sm:$0x3] 0.0
        %732 = vst [vmem:[#allocation2 + $0x18] sm:$0xff] 0.0
        %733 = vst [vmem:[#allocation2 + $0x20] sm:$0xff] 0.0
        %734 = vst [vmem:[#allocation2 + $0x28] sm:$0x3] 0.0
        %735 = vst [vmem:[#allocation2 + $0x30] sm:$0xff] 0.0
        %736 = vst [vmem:[#allocation2 + $0x38] sm:$0xff] 0.0
        %737 = vst [vmem:[#allocation2 + $0x40] sm:$0x3] 0.0
        %738 = vst [vmem:[#allocation2 + $0x48] sm:$0xff] 0.0
        %739 = vst [vmem:[#allocation2 + $0x50] sm:$0xff] 0.0
        %740 = vst [vmem:[#allocation2 + $0x58] sm:$0x3] 0.0
        %741 = vst [vmem:[#allocation2 + $0x60] sm:$0xff] 0.0
        %742 = vst [vmem:[#allocation2 + $0x68] sm:$0xff] 0.0
        %743 = vst [vmem:[#allocation2 + $0x70] sm:$0x3] 0.0
        %744 = vst [vmem:[#allocation2 + $0x78] sm:$0xff] 0.0
        %745 = vst [vmem:[#allocation2 + $0x80] sm:$0xff] 0.0
        %746 = vst [vmem:[#allocation2 + $0x88] sm:$0x3] 0.0
        %747 = vst [vmem:[#allocation2 + $0x90] sm:$0xff] 0.0
        %748 = vst [vmem:[#allocation2 + $0x98] sm:$0xff] 0.0
        %749 = vst [vmem:[#allocation2 + $0xa0] sm:$0x3] 0.0
        %750 = vst [vmem:[#allocation2 + $0xa8] sm:$0xff] 0.0
        %751 = vst [vmem:[#allocation2 + $0xb0] sm:$0xff] 0.0
        %752 = vst [vmem:[#allocation2 + $0xb8] sm:$0x3] 0.0
        %753 = vst [vmem:[#allocation2 + $0xc0] sm:$0xff] 0.0
        %754 = vst [vmem:[#allocation2 + $0xc8] sm:$0xff] 0.0
        %755 = vst [vmem:[#allocation2 + $0xd0] sm:$0x3] 0.0
        %756 = vst [vmem:[#allocation2 + $0xd8] sm:$0xff] 0.0
        %757 = vst [vmem:[#allocation2 + $0xe0] sm:$0xff] 0.0
        %758 = vst [vmem:[#allocation2 + $0xe8] sm:$0x3] 0.0
        %759 = vst [vmem:[#allocation2 + $0xf0] sm:$0xff] 0.0
        %760 = vst [vmem:[#allocation2 + $0xf8] sm:$0xff] 0.0
        %761 = vst [vmem:[#allocation2 + $0x100] sm:$0x3] 0.0
        %762 = vst [vmem:[#allocation2 + $0x108] sm:$0xff] 0.0
        %763 = vst [vmem:[#allocation2 + $0x110] sm:$0xff] 0.0
        %764 = vst [vmem:[#allocation2 + $0x118] sm:$0x3] 0.0
        %765 = vst [vmem:[#allocation2 + $0x120] sm:$0xff] 0.0
        %766 = vst [vmem:[#allocation2 + $0x128] sm:$0xff] 0.0
        %767 = vst [vmem:[#allocation2 + $0x130] sm:$0x3] 0.0
        %768 = vst [vmem:[#allocation2 + $0x138] sm:$0xff] 0.0
        %769 = vst [vmem:[#allocation2 + $0x140] sm:$0xff] 0.0
        %770 = vst [vmem:[#allocation2 + $0x148] sm:$0x3] 0.0
        %771 = vst [vmem:[#allocation2 + $0x150] sm:$0xff] 0.0
        %772 = vst [vmem:[#allocation2 + $0x158] sm:$0xff] 0.0
        %773 = vst [vmem:[#allocation2 + $0x160] sm:$0x3] 0.0
        %774 = vst [vmem:[#allocation2 + $0x168] sm:$0xff] 0.0
        %775 = vst [vmem:[#allocation2 + $0x170] sm:$0xff] 0.0
        %776 = vst [vmem:[#allocation2 + $0x178] sm:$0x3] 0.0
        %777 = vst [vmem:[#allocation2 + $0x180] sm:$0xff] 0.0
        %778 = vst [vmem:[#allocation2 + $0x188] sm:$0xff] 0.0
        %779 = vst [vmem:[#allocation2 + $0x190] sm:$0x3] 0.0
        %780 = vst [vmem:[#allocation2 + $0x198] sm:$0xff] 0.0
        %781 = vst [vmem:[#allocation2 + $0x1a0] sm:$0xff] 0.0
        %782 = vst [vmem:[#allocation2 + $0x1a8] sm:$0x3] 0.0
        %s783 = scalar_lea.vmem [#allocation2], 24
        %784 = vst [vmem:[%s783 + $0x1] sm:$0xff] %v697
        %785 = vst [vmem:[%s783 + $0x9] sm:$0xff] %v698
        %786 = vst [vmem:[%s783 + $0x19] sm:$0xff] %v699
        %787 = vst [vmem:[%s783 + $0x21] sm:$0xff] %v700
        %788 = vst [vmem:[%s783 + $0x31] sm:$0xff] %v701
        %789 = vst [vmem:[%s783 + $0x39] sm:$0xff] %v702
        %790 = vst [vmem:[%s783 + $0x49] sm:$0xff] %v703
        %791 = vst [vmem:[%s783 + $0x51] sm:$0xff] %v704
        %792 = vst [vmem:[%s783 + $0x61] sm:$0xff] %v705
        %793 = vst [vmem:[%s783 + $0x69] sm:$0xff] %v706
        %794 = vst [vmem:[%s783 + $0x79] sm:$0xff] %v707
        %795 = vst [vmem:[%s783 + $0x81] sm:$0xff] %v708
        %796 = vst [vmem:[%s783 + $0x91] sm:$0xff] %v709
        %797 = vst [vmem:[%s783 + $0x99] sm:$0xff] %v710
        %798 = vst [vmem:[%s783 + $0xa9] sm:$0xff] %v711
        %799 = vst [vmem:[%s783 + $0xb1] sm:$0xff] %v712
        %800 = vst [vmem:[%s783 + $0xc1] sm:$0xff] %v713
        %801 = vst [vmem:[%s783 + $0xc9] sm:$0xff] %v714
        %802 = vst [vmem:[%s783 + $0xd9] sm:$0xff] %v715
        %803 = vst [vmem:[%s783 + $0xe1] sm:$0xff] %v716
        %804 = vst [vmem:[%s783 + $0xf1] sm:$0xff] %v717
        %805 = vst [vmem:[%s783 + $0xf9] sm:$0xff] %v718
        %806 = vst [vmem:[%s783 + $0x109] sm:$0xff] %v719
        %807 = vst [vmem:[%s783 + $0x111] sm:$0xff] %v720
        %808 = vst [vmem:[%s783 + $0x121] sm:$0xff] %v721
        %809 = vst [vmem:[%s783 + $0x129] sm:$0xff] %v722
        %810 = vst [vmem:[%s783 + $0x139] sm:$0xff] %v723
        %811 = vst [vmem:[%s783 + $0x141] sm:$0xff] %v724
        %812 = vst [vmem:[%s783 + $0x151] sm:$0xff] %v725
        %813 = vst [vmem:[%s783 + $0x159] sm:$0xff] %v726
        %814 = vst [vmem:[%s783 + $0x169] sm:$0xff] %v727
        %815 = vst [vmem:[%s783 + $0x171] sm:$0xff] %v728
        %v816 = vld [vmem:[#allocation2] sm:$0xff]
        %v817 = vld [vmem:[#allocation2 + $0x8] sm:$0xff]
        %v818 = vld [vmem:[#allocation2 + $0x10] sm:$0x3]
        %v819 = vld [vmem:[#allocation2 + $0x18] sm:$0xff]
        %v820 = vld [vmem:[#allocation2 + $0x20] sm:$0xff]
        %v821 = vld [vmem:[#allocation2 + $0x28] sm:$0x3]
        %v822 = vld [vmem:[#allocation2 + $0x30] sm:$0xff]
        %v823 = vld [vmem:[#allocation2 + $0x38] sm:$0xff]
        %v824 = vld [vmem:[#allocation2 + $0x40] sm:$0x3]
        %v825 = vld [vmem:[#allocation2 + $0x48] sm:$0xff]
        %v826 = vld [vmem:[#allocation2 + $0x50] sm:$0xff]
        %v827 = vld [vmem:[#allocation2 + $0x58] sm:$0x3]
        %v828 = vld [vmem:[#allocation2 + $0x60] sm:$0xff]
        %v829 = vld [vmem:[#allocation2 + $0x68] sm:$0xff]
        %v830 = vld [vmem:[#allocation2 + $0x70] sm:$0x3]
        %v831 = vld [vmem:[#allocation2 + $0x78] sm:$0xff]
        %v832 = vld [vmem:[#allocation2 + $0x80] sm:$0xff]
        %v833 = vld [vmem:[#allocation2 + $0x88] sm:$0x3]
        %v834 = vld [vmem:[#allocation2 + $0x90] sm:$0xff]
        %v835 = vld [vmem:[#allocation2 + $0x98] sm:$0xff]
        %v836 = vld [vmem:[#allocation2 + $0xa0] sm:$0x3]
        %v837 = vld [vmem:[#allocation2 + $0xa8] sm:$0xff]
        %v838 = vld [vmem:[#allocation2 + $0xb0] sm:$0xff]
        %v839 = vld [vmem:[#allocation2 + $0xb8] sm:$0x3]
        %v840 = vld [vmem:[#allocation2 + $0xc0] sm:$0xff]
        %v841 = vld [vmem:[#allocation2 + $0xc8] sm:$0xff]
        %v842 = vld [vmem:[#allocation2 + $0xd0] sm:$0x3]
        %v843 = vld [vmem:[#allocation2 + $0xd8] sm:$0xff]
        %v844 = vld [vmem:[#allocation2 + $0xe0] sm:$0xff]
        %v845 = vld [vmem:[#allocation2 + $0xe8] sm:$0x3]
        %v846 = vld [vmem:[#allocation2 + $0xf0] sm:$0xff]
        %v847 = vld [vmem:[#allocation2 + $0xf8] sm:$0xff]
        %v848 = vld [vmem:[#allocation2 + $0x100] sm:$0x3]
        %v849 = vld [vmem:[#allocation2 + $0x108] sm:$0xff]
        %v850 = vld [vmem:[#allocation2 + $0x110] sm:$0xff]
        %v851 = vld [vmem:[#allocation2 + $0x118] sm:$0x3]
        %v852 = vld [vmem:[#allocation2 + $0x120] sm:$0xff]
        %v853 = vld [vmem:[#allocation2 + $0x128] sm:$0xff]
        %v854 = vld [vmem:[#allocation2 + $0x130] sm:$0x3]
        %v855 = vld [vmem:[#allocation2 + $0x138] sm:$0xff]
        %v856 = vld [vmem:[#allocation2 + $0x140] sm:$0xff]
        %v857 = vld [vmem:[#allocation2 + $0x148] sm:$0x3]
        %v858 = vld [vmem:[#allocation2 + $0x150] sm:$0xff]
        %v859 = vld [vmem:[#allocation2 + $0x158] sm:$0xff]
        %v860 = vld [vmem:[#allocation2 + $0x160] sm:$0x3]
        %v861 = vld [vmem:[#allocation2 + $0x168] sm:$0xff]
        %v862 = vld [vmem:[#allocation2 + $0x170] sm:$0xff]
        %v863 = vld [vmem:[#allocation2 + $0x178] sm:$0x3]
        %v864 = vld [vmem:[#allocation2 + $0x180] sm:$0xff]
        %v865 = vld [vmem:[#allocation2 + $0x188] sm:$0xff]
        %v866 = vld [vmem:[#allocation2 + $0x190] sm:$0x3]
        %v867 = vld [vmem:[#allocation2 + $0x198] sm:$0xff]
        %v868 = vld [vmem:[#allocation2 + $0x1a0] sm:$0xff]
        %v869 = vld [vmem:[#allocation2 + $0x1a8] sm:$0x3]
        %v870 = vld [vmem:[#allocation8] sm:$0x1]
        %v871 = vperm.slane %v870, 0
        %v872 = vmul.f32 %v816, %v871
        %v873 = vmul.f32 %v817, %v871
        %v874 = vmul.f32 %v819, %v871
        %v875 = vmul.f32 %v820, %v871
        %v876 = vmul.f32 %v822, %v871
        %v877 = vmul.f32 %v823, %v871
        %v878 = vmul.f32 %v825, %v871
        %v879 = vmul.f32 %v826, %v871
        %v880 = vmul.f32 %v828, %v871
        %v881 = vmul.f32 %v829, %v871
        %v882 = vmul.f32 %v831, %v871
        %v883 = vmul.f32 %v832, %v871
        %v884 = vmul.f32 %v834, %v871
        %v885 = vmul.f32 %v835, %v871
        %v886 = vmul.f32 %v837, %v871
        %v887 = vmul.f32 %v838, %v871
        %v888 = vmul.f32 %v840, %v871
        %v889 = vmul.f32 %v841, %v871
        %v890 = vmul.f32 %v843, %v871
        %v891 = vmul.f32 %v844, %v871
        %v892 = vmul.f32 %v846, %v871
        %v893 = vmul.f32 %v847, %v871
        %v894 = vmul.f32 %v849, %v871
        %v895 = vmul.f32 %v850, %v871
        %v896 = vmul.f32 %v852, %v871
        %v897 = vmul.f32 %v853, %v871
        %v898 = vmul.f32 %v855, %v871
        %v899 = vmul.f32 %v856, %v871
        %v900 = vmul.f32 %v858, %v871
        %v901 = vmul.f32 %v859, %v871
        %v902 = vmul.f32 %v861, %v871
        %v903 = vmul.f32 %v862, %v871
        %v904 = vadd.f32 %v872, 0.0
        %v905 = vadd.f32 %v873, 0.0
        %v906 = vadd.f32 %v874, 0.0
        %v907 = vadd.f32 %v875, 0.0
        %v908 = vadd.f32 %v876, 0.0
        %v909 = vadd.f32 %v877, 0.0
        %v910 = vadd.f32 %v878, 0.0
        %v911 = vadd.f32 %v879, 0.0
        %v912 = vadd.f32 %v880, 0.0
        %v913 = vadd.f32 %v881, 0.0
        %v914 = vadd.f32 %v882, 0.0
        %v915 = vadd.f32 %v883, 0.0
        %v916 = vadd.f32 %v884, 0.0
        %v917 = vadd.f32 %v885, 0.0
        %v918 = vadd.f32 %v886, 0.0
        %v919 = vadd.f32 %v887, 0.0
        %v920 = vadd.f32 %v888, 0.0
        %v921 = vadd.f32 %v889, 0.0
        %v922 = vadd.f32 %v890, 0.0
        %v923 = vadd.f32 %v891, 0.0
        %v924 = vadd.f32 %v892, 0.0
        %v925 = vadd.f32 %v893, 0.0
        %v926 = vadd.f32 %v894, 0.0
        %v927 = vadd.f32 %v895, 0.0
        %v928 = vadd.f32 %v896, 0.0
        %v929 = vadd.f32 %v897, 0.0
        %v930 = vadd.f32 %v898, 0.0
        %v931 = vadd.f32 %v899, 0.0
        %v932 = vadd.f32 %v900, 0.0
        %v933 = vadd.f32 %v901, 0.0
        %v934 = vadd.f32 %v902, 0.0
        %v935 = vadd.f32 %v903, 0.0
        %v936 = vld [vmem:[#allocation8 + $0x1] sm:$0x1]
        %v937 = vperm.slane %v936, 0
        %v938 = vmul.f32 %v816, %v937
        %v939 = vmul.f32 %v817, %v937
        %v940 = vmul.f32 %v818, %v937
        %v941 = vmul.f32 %v819, %v937
        %v942 = vmul.f32 %v820, %v937
        %v943 = vmul.f32 %v821, %v937
        %v944 = vmul.f32 %v822, %v937
        %v945 = vmul.f32 %v823, %v937
        %v946 = vmul.f32 %v824, %v937
        %v947 = vmul.f32 %v825, %v937
        %v948 = vmul.f32 %v826, %v937
        %v949 = vmul.f32 %v827, %v937
        %v950 = vmul.f32 %v828, %v937
        %v951 = vmul.f32 %v829, %v937
        %v952 = vmul.f32 %v830, %v937
        %v953 = vmul.f32 %v831, %v937
        %v954 = vmul.f32 %v832, %v937
        %v955 = vmul.f32 %v833, %v937
        %v956 = vmul.f32 %v834, %v937
        %v957 = vmul.f32 %v835, %v937
        %v958 = vmul.f32 %v836, %v937
        %v959 = vmul.f32 %v837, %v937
        %v960 = vmul.f32 %v838, %v937
        %v961 = vmul.f32 %v839, %v937
        %v962 = vmul.f32 %v840, %v937
        %v963 = vmul.f32 %v841, %v937
        %v964 = vmul.f32 %v842, %v937
        %v965 = vmul.f32 %v843, %v937
        %v966 = vmul.f32 %v844, %v937
        %v967 = vmul.f32 %v845, %v937
        %v968 = vmul.f32 %v846, %v937
        %v969 = vmul.f32 %v847, %v937
        %v970 = vmul.f32 %v848, %v937
        %v971 = vmul.f32 %v849, %v937
        %v972 = vmul.f32 %v850, %v937
        %v973 = vmul.f32 %v851, %v937
        %v974 = vmul.f32 %v852, %v937
        %v975 = vmul.f32 %v853, %v937
        %v976 = vmul.f32 %v854, %v937
        %v977 = vmul.f32 %v855, %v937
        %v978 = vmul.f32 %v856, %v937
        %v979 = vmul.f32 %v857, %v937
        %v980 = vmul.f32 %v858, %v937
        %v981 = vmul.f32 %v859, %v937
        %v982 = vmul.f32 %v860, %v937
        %v983 = vmul.f32 %v861, %v937
        %v984 = vmul.f32 %v862, %v937
        %v985 = vmul.f32 %v863, %v937
        %vm1034 = vcmask 1046528
        %v1035 = vrot.slane %v938, 1
        %v1036 = vrot.slane %v939, 1
        %v1037 = vsel %vm1034, %v1035, %v1036
        %v1038 = vrot.slane %v940, 1
        %v1039 = vsel %vm1034, %v1036, %v1038
        %v1040 = vrot.slane %v941, 1
        %v1041 = vrot.slane %v942, 1
        %v1042 = vsel %vm1034, %v1040, %v1041
        %v1043 = vrot.slane %v943, 1
        %v1044 = vsel %vm1034, %v1041, %v1043
        %v1045 = vrot.slane %v944, 1
        %v1046 = vrot.slane %v945, 1
        %v1047 = vsel %vm1034, %v1045, %v1046
        %v1048 = vrot.slane %v946, 1
        %v1049 = vsel %vm1034, %v1046, %v1048
        %v1050 = vrot.slane %v947, 1
        %v1051 = vrot.slane %v948, 1
        %v1052 = vsel %vm1034, %v1050, %v1051
        %v1053 = vrot.slane %v949, 1
        %v1054 = vsel %vm1034, %v1051, %v1053
        %v1055 = vrot.slane %v950, 1
        %v1056 = vrot.slane %v951, 1
        %v1057 = vsel %vm1034, %v1055, %v1056
        %v1058 = vrot.slane %v952, 1
        %v1059 = vsel %vm1034, %v1056, %v1058
        %v1060 = vrot.slane %v953, 1
        %v1061 = vrot.slane %v954, 1
        %v1062 = vsel %vm1034, %v1060, %v1061
        %v1063 = vrot.slane %v955, 1
        %v1064 = vsel %vm1034, %v1061, %v1063
        %v1065 = vrot.slane %v956, 1
        %v1066 = vrot.slane %v957, 1
        %v1067 = vsel %vm1034, %v1065, %v1066
        %v1068 = vrot.slane %v958, 1
        %v1069 = vsel %vm1034, %v1066, %v1068
        %v1070 = vrot.slane %v959, 1
        %v1071 = vrot.slane %v960, 1
        %v1072 = vsel %vm1034, %v1070, %v1071
        %v1073 = vrot.slane %v961, 1
        %v1074 = vsel %vm1034, %v1071, %v1073
        %v1075 = vrot.slane %v962, 1
        %v1076 = vrot.slane %v963, 1
        %v1077 = vsel %vm1034, %v1075, %v1076
        %v1078 = vrot.slane %v964, 1
        %v1079 = vsel %vm1034, %v1076, %v1078
        %v1080 = vrot.slane %v965, 1
        %v1081 = vrot.slane %v966, 1
        %v1082 = vsel %vm1034, %v1080, %v1081
        %v1083 = vrot.slane %v967, 1
        %v1084 = vsel %vm1034, %v1081, %v1083
        %v1085 = vrot.slane %v968, 1
        %v1086 = vrot.slane %v969, 1
        %v1087 = vsel %vm1034, %v1085, %v1086
        %v1088 = vrot.slane %v970, 1
        %v1089 = vsel %vm1034, %v1086, %v1088
        %v1090 = vrot.slane %v971, 1
        %v1091 = vrot.slane %v972, 1
        %v1092 = vsel %vm1034, %v1090, %v1091
        %v1093 = vrot.slane %v973, 1
        %v1094 = vsel %vm1034, %v1091, %v1093
        %v1095 = vrot.slane %v974, 1
        %v1096 = vrot.slane %v975, 1
        %v1097 = vsel %vm1034, %v1095, %v1096
        %v1098 = vrot.slane %v976, 1
        %v1099 = vsel %vm1034, %v1096, %v1098
        %v1100 = vrot.slane %v977, 1
        %v1101 = vrot.slane %v978, 1
        %v1102 = vsel %vm1034, %v1100, %v1101
        %v1103 = vrot.slane %v979, 1
        %v1104 = vsel %vm1034, %v1101, %v1103
        %v1105 = vrot.slane %v980, 1
        %v1106 = vrot.slane %v981, 1
        %v1107 = vsel %vm1034, %v1105, %v1106
        %v1108 = vrot.slane %v982, 1
        %v1109 = vsel %vm1034, %v1106, %v1108
        %v1110 = vrot.slane %v983, 1
        %v1111 = vrot.slane %v984, 1
        %v1112 = vsel %vm1034, %v1110, %v1111
        %v1113 = vrot.slane %v985, 1
        %v1114 = vsel %vm1034, %v1111, %v1113
        %v1147 = vadd.f32 %v904, %v1037
        %v1148 = vadd.f32 %v905, %v1039
        %v1149 = vadd.f32 %v906, %v1042
        %v1150 = vadd.f32 %v907, %v1044
        %v1151 = vadd.f32 %v908, %v1047
        %v1152 = vadd.f32 %v909, %v1049
        %v1153 = vadd.f32 %v910, %v1052
        %v1154 = vadd.f32 %v911, %v1054
        %v1155 = vadd.f32 %v912, %v1057
        %v1156 = vadd.f32 %v913, %v1059
        %v1157 = vadd.f32 %v914, %v1062
        %v1158 = vadd.f32 %v915, %v1064
        %v1159 = vadd.f32 %v916, %v1067
        %v1160 = vadd.f32 %v917, %v1069
        %v1161 = vadd.f32 %v918, %v1072
        %v1162 = vadd.f32 %v919, %v1074
        %v1163 = vadd.f32 %v920, %v1077
        %v1164 = vadd.f32 %v921, %v1079
        %v1165 = vadd.f32 %v922, %v1082
        %v1166 = vadd.f32 %v923, %v1084
        %v1167 = vadd.f32 %v924, %v1087
        %v1168 = vadd.f32 %v925, %v1089
        %v1169 = vadd.f32 %v926, %v1092
        %v1170 = vadd.f32 %v927, %v1094
        %v1171 = vadd.f32 %v928, %v1097
        %v1172 = vadd.f32 %v929, %v1099
        %v1173 = vadd.f32 %v930, %v1102
        %v1174 = vadd.f32 %v931, %v1104
        %v1175 = vadd.f32 %v932, %v1107
        %v1176 = vadd.f32 %v933, %v1109
        %v1177 = vadd.f32 %v934, %v1112
        %v1178 = vadd.f32 %v935, %v1114
        %v1179 = vld [vmem:[#allocation8 + $0x2] sm:$0x1]
        %v1180 = vperm.slane %v1179, 0
        %v1181 = vmul.f32 %v816, %v1180
        %v1182 = vmul.f32 %v817, %v1180
        %v1183 = vmul.f32 %v818, %v1180
        %v1184 = vmul.f32 %v819, %v1180
        %v1185 = vmul.f32 %v820, %v1180
        %v1186 = vmul.f32 %v821, %v1180
        %v1187 = vmul.f32 %v822, %v1180
        %v1188 = vmul.f32 %v823, %v1180
        %v1189 = vmul.f32 %v824, %v1180
        %v1190 = vmul.f32 %v825, %v1180
        %v1191 = vmul.f32 %v826, %v1180
        %v1192 = vmul.f32 %v827, %v1180
        %v1193 = vmul.f32 %v828, %v1180
        %v1194 = vmul.f32 %v829, %v1180
        %v1195 = vmul.f32 %v830, %v1180
        %v1196 = vmul.f32 %v831, %v1180
        %v1197 = vmul.f32 %v832, %v1180
        %v1198 = vmul.f32 %v833, %v1180
        %v1199 = vmul.f32 %v834, %v1180
        %v1200 = vmul.f32 %v835, %v1180
        %v1201 = vmul.f32 %v836, %v1180
        %v1202 = vmul.f32 %v837, %v1180
        %v1203 = vmul.f32 %v838, %v1180
        %v1204 = vmul.f32 %v839, %v1180
        %v1205 = vmul.f32 %v840, %v1180
        %v1206 = vmul.f32 %v841, %v1180
        %v1207 = vmul.f32 %v842, %v1180
        %v1208 = vmul.f32 %v843, %v1180
        %v1209 = vmul.f32 %v844, %v1180
        %v1210 = vmul.f32 %v845, %v1180
        %v1211 = vmul.f32 %v846, %v1180
        %v1212 = vmul.f32 %v847, %v1180
        %v1213 = vmul.f32 %v848, %v1180
        %v1214 = vmul.f32 %v849, %v1180
        %v1215 = vmul.f32 %v850, %v1180
        %v1216 = vmul.f32 %v851, %v1180
        %v1217 = vmul.f32 %v852, %v1180
        %v1218 = vmul.f32 %v853, %v1180
        %v1219 = vmul.f32 %v854, %v1180
        %v1220 = vmul.f32 %v855, %v1180
        %v1221 = vmul.f32 %v856, %v1180
        %v1222 = vmul.f32 %v857, %v1180
        %v1223 = vmul.f32 %v858, %v1180
        %v1224 = vmul.f32 %v859, %v1180
        %v1225 = vmul.f32 %v860, %v1180
        %v1226 = vmul.f32 %v861, %v1180
        %v1227 = vmul.f32 %v862, %v1180
        %v1228 = vmul.f32 %v863, %v1180
        %vm1277 = vcmask 1045504
        %v1278 = vrot.slane %v1181, 2
        %v1279 = vrot.slane %v1182, 2
        %v1280 = vsel %vm1277, %v1278, %v1279
        %v1281 = vrot.slane %v1183, 2
        %v1282 = vsel %vm1277, %v1279, %v1281
        %v1283 = vrot.slane %v1184, 2
        %v1284 = vrot.slane %v1185, 2
        %v1285 = vsel %vm1277, %v1283, %v1284
        %v1286 = vrot.slane %v1186, 2
        %v1287 = vsel %vm1277, %v1284, %v1286
        %v1288 = vrot.slane %v1187, 2
        %v1289 = vrot.slane %v1188, 2
        %v1290 = vsel %vm1277, %v1288, %v1289
        %v1291 = vrot.slane %v1189, 2
        %v1292 = vsel %vm1277, %v1289, %v1291
        %v1293 = vrot.slane %v1190, 2
        %v1294 = vrot.slane %v1191, 2
        %v1295 = vsel %vm1277, %v1293, %v1294
        %v1296 = vrot.slane %v1192, 2
        %v1297 = vsel %vm1277, %v1294, %v1296
        %v1298 = vrot.slane %v1193, 2
        %v1299 = vrot.slane %v1194, 2
        %v1300 = vsel %vm1277, %v1298, %v1299
        %v1301 = vrot.slane %v1195, 2
        %v1302 = vsel %vm1277, %v1299, %v1301
        %v1303 = vrot.slane %v1196, 2
        %v1304 = vrot.slane %v1197, 2
        %v1305 = vsel %vm1277, %v1303, %v1304
        %v1306 = vrot.slane %v1198, 2
        %v1307 = vsel %vm1277, %v1304, %v1306
        %v1308 = vrot.slane %v1199, 2
        %v1309 = vrot.slane %v1200, 2
        %v1310 = vsel %vm1277, %v1308, %v1309
        %v1311 = vrot.slane %v1201, 2
        %v1312 = vsel %vm1277, %v1309, %v1311
        %v1313 = vrot.slane %v1202, 2
        %v1314 = vrot.slane %v1203, 2
        %v1315 = vsel %vm1277, %v1313, %v1314
        %v1316 = vrot.slane %v1204, 2
        %v1317 = vsel %vm1277, %v1314, %v1316
        %v1318 = vrot.slane %v1205, 2
        %v1319 = vrot.slane %v1206, 2
        %v1320 = vsel %vm1277, %v1318, %v1319
        %v1321 = vrot.slane %v1207, 2
        %v1322 = vsel %vm1277, %v1319, %v1321
        %v1323 = vrot.slane %v1208, 2
        %v1324 = vrot.slane %v1209, 2
        %v1325 = vsel %vm1277, %v1323, %v1324
        %v1326 = vrot.slane %v1210, 2
        %v1327 = vsel %vm1277, %v1324, %v1326
        %v1328 = vrot.slane %v1211, 2
        %v1329 = vrot.slane %v1212, 2
        %v1330 = vsel %vm1277, %v1328, %v1329
        %v1331 = vrot.slane %v1213, 2
        %v1332 = vsel %vm1277, %v1329, %v1331
        %v1333 = vrot.slane %v1214, 2
        %v1334 = vrot.slane %v1215, 2
        %v1335 = vsel %vm1277, %v1333, %v1334
        %v1336 = vrot.slane %v1216, 2
        %v1337 = vsel %vm1277, %v1334, %v1336
        %v1338 = vrot.slane %v1217, 2
        %v1339 = vrot.slane %v1218, 2
        %v1340 = vsel %vm1277, %v1338, %v1339
        %v1341 = vrot.slane %v1219, 2
        %v1342 = vsel %vm1277, %v1339, %v1341
        %v1343 = vrot.slane %v1220, 2
        %v1344 = vrot.slane %v1221, 2
        %v1345 = vsel %vm1277, %v1343, %v1344
        %v1346 = vrot.slane %v1222, 2
        %v1347 = vsel %vm1277, %v1344, %v1346
        %v1348 = vrot.slane %v1223, 2
        %v1349 = vrot.slane %v1224, 2
        %v1350 = vsel %vm1277, %v1348, %v1349
        %v1351 = vrot.slane %v1225, 2
        %v1352 = vsel %vm1277, %v1349, %v1351
        %v1353 = vrot.slane %v1226, 2
        %v1354 = vrot.slane %v1227, 2
        %v1355 = vsel %vm1277, %v1353, %v1354
        %v1356 = vrot.slane %v1228, 2
        %v1357 = vsel %vm1277, %v1354, %v1356
        %v1390 = vadd.f32 %v1147, %v1280
        %v1391 = vadd.f32 %v1148, %v1282
        %v1392 = vadd.f32 %v1149, %v1285
        %v1393 = vadd.f32 %v1150, %v1287
        %v1394 = vadd.f32 %v1151, %v1290
        %v1395 = vadd.f32 %v1152, %v1292
        %v1396 = vadd.f32 %v1153, %v1295
        %v1397 = vadd.f32 %v1154, %v1297
        %v1398 = vadd.f32 %v1155, %v1300
        %v1399 = vadd.f32 %v1156, %v1302
        %v1400 = vadd.f32 %v1157, %v1305
        %v1401 = vadd.f32 %v1158, %v1307
        %v1402 = vadd.f32 %v1159, %v1310
        %v1403 = vadd.f32 %v1160, %v1312
        %v1404 = vadd.f32 %v1161, %v1315
        %v1405 = vadd.f32 %v1162, %v1317
        %v1406 = vadd.f32 %v1163, %v1320
        %v1407 = vadd.f32 %v1164, %v1322
        %v1408 = vadd.f32 %v1165, %v1325
        %v1409 = vadd.f32 %v1166, %v1327
        %v1410 = vadd.f32 %v1167, %v1330
        %v1411 = vadd.f32 %v1168, %v1332
        %v1412 = vadd.f32 %v1169, %v1335
        %v1413 = vadd.f32 %v1170, %v1337
        %v1414 = vadd.f32 %v1171, %v1340
        %v1415 = vadd.f32 %v1172, %v1342
        %v1416 = vadd.f32 %v1173, %v1345
        %v1417 = vadd.f32 %v1174, %v1347
        %v1418 = vadd.f32 %v1175, %v1350
        %v1419 = vadd.f32 %v1176, %v1352
        %v1420 = vadd.f32 %v1177, %v1355
        %v1421 = vadd.f32 %v1178, %v1357
        %v1422 = vld [vmem:[#allocation8 + $0x3] sm:$0x1]
        %v1423 = vperm.slane %v1422, 0
        %v1424 = vmul.f32 %v819, %v1423
        %v1425 = vmul.f32 %v820, %v1423
        %v1426 = vmul.f32 %v822, %v1423
        %v1427 = vmul.f32 %v823, %v1423
        %v1428 = vmul.f32 %v825, %v1423
        %v1429 = vmul.f32 %v826, %v1423
        %v1430 = vmul.f32 %v828, %v1423
        %v1431 = vmul.f32 %v829, %v1423
        %v1432 = vmul.f32 %v831, %v1423
        %v1433 = vmul.f32 %v832, %v1423
        %v1434 = vmul.f32 %v834, %v1423
        %v1435 = vmul.f32 %v835, %v1423
        %v1436 = vmul.f32 %v837, %v1423
        %v1437 = vmul.f32 %v838, %v1423
        %v1438 = vmul.f32 %v840, %v1423
        %v1439 = vmul.f32 %v841, %v1423
        %v1440 = vmul.f32 %v843, %v1423
        %v1441 = vmul.f32 %v844, %v1423
        %v1442 = vmul.f32 %v846, %v1423
        %v1443 = vmul.f32 %v847, %v1423
        %v1444 = vmul.f32 %v849, %v1423
        %v1445 = vmul.f32 %v850, %v1423
        %v1446 = vmul.f32 %v852, %v1423
        %v1447 = vmul.f32 %v853, %v1423
        %v1448 = vmul.f32 %v855, %v1423
        %v1449 = vmul.f32 %v856, %v1423
        %v1450 = vmul.f32 %v858, %v1423
        %v1451 = vmul.f32 %v859, %v1423
        %v1452 = vmul.f32 %v861, %v1423
        %v1453 = vmul.f32 %v862, %v1423
        %v1454 = vmul.f32 %v864, %v1423
        %v1455 = vmul.f32 %v865, %v1423
        %v1456 = vadd.f32 %v1390, %v1424
        %v1457 = vadd.f32 %v1391, %v1425
        %v1458 = vadd.f32 %v1392, %v1426
        %v1459 = vadd.f32 %v1393, %v1427
        %v1460 = vadd.f32 %v1394, %v1428
        %v1461 = vadd.f32 %v1395, %v1429
        %v1462 = vadd.f32 %v1396, %v1430
        %v1463 = vadd.f32 %v1397, %v1431
        %v1464 = vadd.f32 %v1398, %v1432
        %v1465 = vadd.f32 %v1399, %v1433
        %v1466 = vadd.f32 %v1400, %v1434
        %v1467 = vadd.f32 %v1401, %v1435
        %v1468 = vadd.f32 %v1402, %v1436
        %v1469 = vadd.f32 %v1403, %v1437
        %v1470 = vadd.f32 %v1404, %v1438
        %v1471 = vadd.f32 %v1405, %v1439
        %v1472 = vadd.f32 %v1406, %v1440
        %v1473 = vadd.f32 %v1407, %v1441
        %v1474 = vadd.f32 %v1408, %v1442
        %v1475 = vadd.f32 %v1409, %v1443
        %v1476 = vadd.f32 %v1410, %v1444
        %v1477 = vadd.f32 %v1411, %v1445
        %v1478 = vadd.f32 %v1412, %v1446
        %v1479 = vadd.f32 %v1413, %v1447
        %v1480 = vadd.f32 %v1414, %v1448
        %v1481 = vadd.f32 %v1415, %v1449
        %v1482 = vadd.f32 %v1416, %v1450
        %v1483 = vadd.f32 %v1417, %v1451
        %v1484 = vadd.f32 %v1418, %v1452
        %v1485 = vadd.f32 %v1419, %v1453
        %v1486 = vadd.f32 %v1420, %v1454
        %v1487 = vadd.f32 %v1421, %v1455
        %v1488 = vld [vmem:[#allocation8 + $0x4] sm:$0x1]
        %v1489 = vperm.slane %v1488, 0
        %v1490 = vmul.f32 %v819, %v1489
        %v1491 = vmul.f32 %v820, %v1489
        %v1492 = vmul.f32 %v821, %v1489
        %v1493 = vmul.f32 %v822, %v1489
        %v1494 = vmul.f32 %v823, %v1489
        %v1495 = vmul.f32 %v824, %v1489
        %v1496 = vmul.f32 %v825, %v1489
        %v1497 = vmul.f32 %v826, %v1489
        %v1498 = vmul.f32 %v827, %v1489
        %v1499 = vmul.f32 %v828, %v1489
        %v1500 = vmul.f32 %v829, %v1489
        %v1501 = vmul.f32 %v830, %v1489
        %v1502 = vmul.f32 %v831, %v1489
        %v1503 = vmul.f32 %v832, %v1489
        %v1504 = vmul.f32 %v833, %v1489
        %v1505 = vmul.f32 %v834, %v1489
        %v1506 = vmul.f32 %v835, %v1489
        %v1507 = vmul.f32 %v836, %v1489
        %v1508 = vmul.f32 %v837, %v1489
        %v1509 = vmul.f32 %v838, %v1489
        %v1510 = vmul.f32 %v839, %v1489
        %v1511 = vmul.f32 %v840, %v1489
        %v1512 = vmul.f32 %v841, %v1489
        %v1513 = vmul.f32 %v842, %v1489
        %v1514 = vmul.f32 %v843, %v1489
        %v1515 = vmul.f32 %v844, %v1489
        %v1516 = vmul.f32 %v845, %v1489
        %v1517 = vmul.f32 %v846, %v1489
        %v1518 = vmul.f32 %v847, %v1489
        %v1519 = vmul.f32 %v848, %v1489
        %v1520 = vmul.f32 %v849, %v1489
        %v1521 = vmul.f32 %v850, %v1489
        %v1522 = vmul.f32 %v851, %v1489
        %v1523 = vmul.f32 %v852, %v1489
        %v1524 = vmul.f32 %v853, %v1489
        %v1525 = vmul.f32 %v854, %v1489
        %v1526 = vmul.f32 %v855, %v1489
        %v1527 = vmul.f32 %v856, %v1489
        %v1528 = vmul.f32 %v857, %v1489
        %v1529 = vmul.f32 %v858, %v1489
        %v1530 = vmul.f32 %v859, %v1489
        %v1531 = vmul.f32 %v860, %v1489
        %v1532 = vmul.f32 %v861, %v1489
        %v1533 = vmul.f32 %v862, %v1489
        %v1534 = vmul.f32 %v863, %v1489
        %v1535 = vmul.f32 %v864, %v1489
        %v1536 = vmul.f32 %v865, %v1489
        %v1537 = vmul.f32 %v866, %v1489
        %v1586 = vrot.slane %v1490, 1
        %v1587 = vrot.slane %v1491, 1
        %v1588 = vsel %vm1034, %v1586, %v1587
        %v1589 = vrot.slane %v1492, 1
        %v1590 = vsel %vm1034, %v1587, %v1589
        %v1591 = vrot.slane %v1493, 1
        %v1592 = vrot.slane %v1494, 1
        %v1593 = vsel %vm1034, %v1591, %v1592
        %v1594 = vrot.slane %v1495, 1
        %v1595 = vsel %vm1034, %v1592, %v1594
        %v1596 = vrot.slane %v1496, 1
        %v1597 = vrot.slane %v1497, 1
        %v1598 = vsel %vm1034, %v1596, %v1597
        %v1599 = vrot.slane %v1498, 1
        %v1600 = vsel %vm1034, %v1597, %v1599
        %v1601 = vrot.slane %v1499, 1
        %v1602 = vrot.slane %v1500, 1
        %v1603 = vsel %vm1034, %v1601, %v1602
        %v1604 = vrot.slane %v1501, 1
        %v1605 = vsel %vm1034, %v1602, %v1604
        %v1606 = vrot.slane %v1502, 1
        %v1607 = vrot.slane %v1503, 1
        %v1608 = vsel %vm1034, %v1606, %v1607
        %v1609 = vrot.slane %v1504, 1
        %v1610 = vsel %vm1034, %v1607, %v1609
        %v1611 = vrot.slane %v1505, 1
        %v1612 = vrot.slane %v1506, 1
        %v1613 = vsel %vm1034, %v1611, %v1612
        %v1614 = vrot.slane %v1507, 1
        %v1615 = vsel %vm1034, %v1612, %v1614
        %v1616 = vrot.slane %v1508, 1
        %v1617 = vrot.slane %v1509, 1
        %v1618 = vsel %vm1034, %v1616, %v1617
        %v1619 = vrot.slane %v1510, 1
        %v1620 = vsel %vm1034, %v1617, %v1619
        %v1621 = vrot.slane %v1511, 1
        %v1622 = vrot.slane %v1512, 1
        %v1623 = vsel %vm1034, %v1621, %v1622
        %v1624 = vrot.slane %v1513, 1
        %v1625 = vsel %vm1034, %v1622, %v1624
        %v1626 = vrot.slane %v1514, 1
        %v1627 = vrot.slane %v1515, 1
        %v1628 = vsel %vm1034, %v1626, %v1627
        %v1629 = vrot.slane %v1516, 1
        %v1630 = vsel %vm1034, %v1627, %v1629
        %v1631 = vrot.slane %v1517, 1
        %v1632 = vrot.slane %v1518, 1
        %v1633 = vsel %vm1034, %v1631, %v1632
        %v1634 = vrot.slane %v1519, 1
        %v1635 = vsel %vm1034, %v1632, %v1634
        %v1636 = vrot.slane %v1520, 1
        %v1637 = vrot.slane %v1521, 1
        %v1638 = vsel %vm1034, %v1636, %v1637
        %v1639 = vrot.slane %v1522, 1
        %v1640 = vsel %vm1034, %v1637, %v1639
        %v1641 = vrot.slane %v1523, 1
        %v1642 = vrot.slane %v1524, 1
        %v1643 = vsel %vm1034, %v1641, %v1642
        %v1644 = vrot.slane %v1525, 1
        %v1645 = vsel %vm1034, %v1642, %v1644
        %v1646 = vrot.slane %v1526, 1
        %v1647 = vrot.slane %v1527, 1
        %v1648 = vsel %vm1034, %v1646, %v1647
        %v1649 = vrot.slane %v1528, 1
        %v1650 = vsel %vm1034, %v1647, %v1649
        %v1651 = vrot.slane %v1529, 1
        %v1652 = vrot.slane %v1530, 1
        %v1653 = vsel %vm1034, %v1651, %v1652
        %v1654 = vrot.slane %v1531, 1
        %v1655 = vsel %vm1034, %v1652, %v1654
        %v1656 = vrot.slane %v1532, 1
        %v1657 = vrot.slane %v1533, 1
        %v1658 = vsel %vm1034, %v1656, %v1657
        %v1659 = vrot.slane %v1534, 1
        %v1660 = vsel %vm1034, %v1657, %v1659
        %v1661 = vrot.slane %v1535, 1
        %v1662 = vrot.slane %v1536, 1
        %v1663 = vsel %vm1034, %v1661, %v1662
        %v1664 = vrot.slane %v1537, 1
        %v1665 = vsel %vm1034, %v1662, %v1664
        %v1698 = vadd.f32 %v1456, %v1588
        %v1699 = vadd.f32 %v1457, %v1590
        %v1700 = vadd.f32 %v1458, %v1593
        %v1701 = vadd.f32 %v1459, %v1595
        %v1702 = vadd.f32 %v1460, %v1598
        %v1703 = vadd.f32 %v1461, %v1600
        %v1704 = vadd.f32 %v1462, %v1603
        %v1705 = vadd.f32 %v1463, %v1605
        %v1706 = vadd.f32 %v1464, %v1608
        %v1707 = vadd.f32 %v1465, %v1610
        %v1708 = vadd.f32 %v1466, %v1613
        %v1709 = vadd.f32 %v1467, %v1615
        %v1710 = vadd.f32 %v1468, %v1618
        %v1711 = vadd.f32 %v1469, %v1620
        %v1712 = vadd.f32 %v1470, %v1623
        %v1713 = vadd.f32 %v1471, %v1625
        %v1714 = vadd.f32 %v1472, %v1628
        %v1715 = vadd.f32 %v1473, %v1630
        %v1716 = vadd.f32 %v1474, %v1633
        %v1717 = vadd.f32 %v1475, %v1635
        %v1718 = vadd.f32 %v1476, %v1638
        %v1719 = vadd.f32 %v1477, %v1640
        %v1720 = vadd.f32 %v1478, %v1643
        %v1721 = vadd.f32 %v1479, %v1645
        %v1722 = vadd.f32 %v1480, %v1648
        %v1723 = vadd.f32 %v1481, %v1650
        %v1724 = vadd.f32 %v1482, %v1653
        %v1725 = vadd.f32 %v1483, %v1655
        %v1726 = vadd.f32 %v1484, %v1658
        %v1727 = vadd.f32 %v1485, %v1660
        %v1728 = vadd.f32 %v1486, %v1663
        %v1729 = vadd.f32 %v1487, %v1665
        %v1730 = vld [vmem:[#allocation8 + $0x5] sm:$0x1]
        %v1731 = vperm.slane %v1730, 0
        %v1732 = vmul.f32 %v819, %v1731
        %v1733 = vmul.f32 %v820, %v1731
        %v1734 = vmul.f32 %v821, %v1731
        %v1735 = vmul.f32 %v822, %v1731
        %v1736 = vmul.f32 %v823, %v1731
        %v1737 = vmul.f32 %v824, %v1731
        %v1738 = vmul.f32 %v825, %v1731
        %v1739 = vmul.f32 %v826, %v1731
        %v1740 = vmul.f32 %v827, %v1731
        %v1741 = vmul.f32 %v828, %v1731
        %v1742 = vmul.f32 %v829, %v1731
        %v1743 = vmul.f32 %v830, %v1731
        %v1744 = vmul.f32 %v831, %v1731
        %v1745 = vmul.f32 %v832, %v1731
        %v1746 = vmul.f32 %v833, %v1731
        %v1747 = vmul.f32 %v834, %v1731
        %v1748 = vmul.f32 %v835, %v1731
        %v1749 = vmul.f32 %v836, %v1731
        %v1750 = vmul.f32 %v837, %v1731
        %v1751 = vmul.f32 %v838, %v1731
        %v1752 = vmul.f32 %v839, %v1731
        %v1753 = vmul.f32 %v840, %v1731
        %v1754 = vmul.f32 %v841, %v1731
        %v1755 = vmul.f32 %v842, %v1731
        %v1756 = vmul.f32 %v843, %v1731
        %v1757 = vmul.f32 %v844, %v1731
        %v1758 = vmul.f32 %v845, %v1731
        %v1759 = vmul.f32 %v846, %v1731
        %v1760 = vmul.f32 %v847, %v1731
        %v1761 = vmul.f32 %v848, %v1731
        %v1762 = vmul.f32 %v849, %v1731
        %v1763 = vmul.f32 %v850, %v1731
        %v1764 = vmul.f32 %v851, %v1731
        %v1765 = vmul.f32 %v852, %v1731
        %v1766 = vmul.f32 %v853, %v1731
        %v1767 = vmul.f32 %v854, %v1731
        %v1768 = vmul.f32 %v855, %v1731
        %v1769 = vmul.f32 %v856, %v1731
        %v1770 = vmul.f32 %v857, %v1731
        %v1771 = vmul.f32 %v858, %v1731
        %v1772 = vmul.f32 %v859, %v1731
        %v1773 = vmul.f32 %v860, %v1731
        %v1774 = vmul.f32 %v861, %v1731
        %v1775 = vmul.f32 %v862, %v1731
        %v1776 = vmul.f32 %v863, %v1731
        %v1777 = vmul.f32 %v864, %v1731
        %v1778 = vmul.f32 %v865, %v1731
        %v1779 = vmul.f32 %v866, %v1731
        %v1828 = vrot.slane %v1732, 2
        %v1829 = vrot.slane %v1733, 2
        %v1830 = vsel %vm1277, %v1828, %v1829
        %v1831 = vrot.slane %v1734, 2
        %v1832 = vsel %vm1277, %v1829, %v1831
        %v1833 = vrot.slane %v1735, 2
        %v1834 = vrot.slane %v1736, 2
        %v1835 = vsel %vm1277, %v1833, %v1834
        %v1836 = vrot.slane %v1737, 2
        %v1837 = vsel %vm1277, %v1834, %v1836
        %v1838 = vrot.slane %v1738, 2
        %v1839 = vrot.slane %v1739, 2
        %v1840 = vsel %vm1277, %v1838, %v1839
        %v1841 = vrot.slane %v1740, 2
        %v1842 = vsel %vm1277, %v1839, %v1841
        %v1843 = vrot.slane %v1741, 2
        %v1844 = vrot.slane %v1742, 2
        %v1845 = vsel %vm1277, %v1843, %v1844
        %v1846 = vrot.slane %v1743, 2
        %v1847 = vsel %vm1277, %v1844, %v1846
        %v1848 = vrot.slane %v1744, 2
        %v1849 = vrot.slane %v1745, 2
        %v1850 = vsel %vm1277, %v1848, %v1849
        %v1851 = vrot.slane %v1746, 2
        %v1852 = vsel %vm1277, %v1849, %v1851
        %v1853 = vrot.slane %v1747, 2
        %v1854 = vrot.slane %v1748, 2
        %v1855 = vsel %vm1277, %v1853, %v1854
        %v1856 = vrot.slane %v1749, 2
        %v1857 = vsel %vm1277, %v1854, %v1856
        %v1858 = vrot.slane %v1750, 2
        %v1859 = vrot.slane %v1751, 2
        %v1860 = vsel %vm1277, %v1858, %v1859
        %v1861 = vrot.slane %v1752, 2
        %v1862 = vsel %vm1277, %v1859, %v1861
        %v1863 = vrot.slane %v1753, 2
        %v1864 = vrot.slane %v1754, 2
        %v1865 = vsel %vm1277, %v1863, %v1864
        %v1866 = vrot.slane %v1755, 2
        %v1867 = vsel %vm1277, %v1864, %v1866
        %v1868 = vrot.slane %v1756, 2
        %v1869 = vrot.slane %v1757, 2
        %v1870 = vsel %vm1277, %v1868, %v1869
        %v1871 = vrot.slane %v1758, 2
        %v1872 = vsel %vm1277, %v1869, %v1871
        %v1873 = vrot.slane %v1759, 2
        %v1874 = vrot.slane %v1760, 2
        %v1875 = vsel %vm1277, %v1873, %v1874
        %v1876 = vrot.slane %v1761, 2
        %v1877 = vsel %vm1277, %v1874, %v1876
        %v1878 = vrot.slane %v1762, 2
        %v1879 = vrot.slane %v1763, 2
        %v1880 = vsel %vm1277, %v1878, %v1879
        %v1881 = vrot.slane %v1764, 2
        %v1882 = vsel %vm1277, %v1879, %v1881
        %v1883 = vrot.slane %v1765, 2
        %v1884 = vrot.slane %v1766, 2
        %v1885 = vsel %vm1277, %v1883, %v1884
        %v1886 = vrot.slane %v1767, 2
        %v1887 = vsel %vm1277, %v1884, %v1886
        %v1888 = vrot.slane %v1768, 2
        %v1889 = vrot.slane %v1769, 2
        %v1890 = vsel %vm1277, %v1888, %v1889
        %v1891 = vrot.slane %v1770, 2
        %v1892 = vsel %vm1277, %v1889, %v1891
        %v1893 = vrot.slane %v1771, 2
        %v1894 = vrot.slane %v1772, 2
        %v1895 = vsel %vm1277, %v1893, %v1894
        %v1896 = vrot.slane %v1773, 2
        %v1897 = vsel %vm1277, %v1894, %v1896
        %v1898 = vrot.slane %v1774, 2
        %v1899 = vrot.slane %v1775, 2
        %v1900 = vsel %vm1277, %v1898, %v1899
        %v1901 = vrot.slane %v1776, 2
        %v1902 = vsel %vm1277, %v1899, %v1901
        %v1903 = vrot.slane %v1777, 2
        %v1904 = vrot.slane %v1778, 2
        %v1905 = vsel %vm1277, %v1903, %v1904
        %v1906 = vrot.slane %v1779, 2
        %v1907 = vsel %vm1277, %v1904, %v1906
        %v1940 = vadd.f32 %v1698, %v1830
        %v1941 = vadd.f32 %v1699, %v1832
        %v1942 = vadd.f32 %v1700, %v1835
        %v1943 = vadd.f32 %v1701, %v1837
        %v1944 = vadd.f32 %v1702, %v1840
        %v1945 = vadd.f32 %v1703, %v1842
        %v1946 = vadd.f32 %v1704, %v1845
        %v1947 = vadd.f32 %v1705, %v1847
        %v1948 = vadd.f32 %v1706, %v1850
        %v1949 = vadd.f32 %v1707, %v1852
        %v1950 = vadd.f32 %v1708, %v1855
        %v1951 = vadd.f32 %v1709, %v1857
        %v1952 = vadd.f32 %v1710, %v1860
        %v1953 = vadd.f32 %v1711, %v1862
        %v1954 = vadd.f32 %v1712, %v1865
        %v1955 = vadd.f32 %v1713, %v1867
        %v1956 = vadd.f32 %v1714, %v1870
        %v1957 = vadd.f32 %v1715, %v1872
        %v1958 = vadd.f32 %v1716, %v1875
        %v1959 = vadd.f32 %v1717, %v1877
        %v1960 = vadd.f32 %v1718, %v1880
        %v1961 = vadd.f32 %v1719, %v1882
        %v1962 = vadd.f32 %v1720, %v1885
        %v1963 = vadd.f32 %v1721, %v1887
        %v1964 = vadd.f32 %v1722, %v1890
        %v1965 = vadd.f32 %v1723, %v1892
        %v1966 = vadd.f32 %v1724, %v1895
        %v1967 = vadd.f32 %v1725, %v1897
        %v1968 = vadd.f32 %v1726, %v1900
        %v1969 = vadd.f32 %v1727, %v1902
        %v1970 = vadd.f32 %v1728, %v1905
        %v1971 = vadd.f32 %v1729, %v1907
        %v1972 = vld [vmem:[#allocation8 + $0x6] sm:$0x1]
        %v1973 = vperm.slane %v1972, 0
        %v1974 = vmul.f32 %v822, %v1973
        %v1975 = vmul.f32 %v823, %v1973
        %v1976 = vmul.f32 %v825, %v1973
        %v1977 = vmul.f32 %v826, %v1973
        %v1978 = vmul.f32 %v828, %v1973
        %v1979 = vmul.f32 %v829, %v1973
        %v1980 = vmul.f32 %v831, %v1973
        %v1981 = vmul.f32 %v832, %v1973
        %v1982 = vmul.f32 %v834, %v1973
        %v1983 = vmul.f32 %v835, %v1973
        %v1984 = vmul.f32 %v837, %v1973
        %v1985 = vmul.f32 %v838, %v1973
        %v1986 = vmul.f32 %v840, %v1973
        %v1987 = vmul.f32 %v841, %v1973
        %v1988 = vmul.f32 %v843, %v1973
        %v1989 = vmul.f32 %v844, %v1973
        %v1990 = vmul.f32 %v846, %v1973
        %v1991 = vmul.f32 %v847, %v1973
        %v1992 = vmul.f32 %v849, %v1973
        %v1993 = vmul.f32 %v850, %v1973
        %v1994 = vmul.f32 %v852, %v1973
        %v1995 = vmul.f32 %v853, %v1973
        %v1996 = vmul.f32 %v855, %v1973
        %v1997 = vmul.f32 %v856, %v1973
        %v1998 = vmul.f32 %v858, %v1973
        %v1999 = vmul.f32 %v859, %v1973
        %v2000 = vmul.f32 %v861, %v1973
        %v2001 = vmul.f32 %v862, %v1973
        %v2002 = vmul.f32 %v864, %v1973
        %v2003 = vmul.f32 %v865, %v1973
        %v2004 = vmul.f32 %v867, %v1973
        %v2005 = vmul.f32 %v868, %v1973
        %v2006 = vadd.f32 %v1940, %v1974
        %v2007 = vadd.f32 %v1941, %v1975
        %v2008 = vadd.f32 %v1942, %v1976
        %v2009 = vadd.f32 %v1943, %v1977
        %v2010 = vadd.f32 %v1944, %v1978
        %v2011 = vadd.f32 %v1945, %v1979
        %v2012 = vadd.f32 %v1946, %v1980
        %v2013 = vadd.f32 %v1947, %v1981
        %v2014 = vadd.f32 %v1948, %v1982
        %v2015 = vadd.f32 %v1949, %v1983
        %v2016 = vadd.f32 %v1950, %v1984
        %v2017 = vadd.f32 %v1951, %v1985
        %v2018 = vadd.f32 %v1952, %v1986
        %v2019 = vadd.f32 %v1953, %v1987
        %v2020 = vadd.f32 %v1954, %v1988
        %v2021 = vadd.f32 %v1955, %v1989
        %v2022 = vadd.f32 %v1956, %v1990
        %v2023 = vadd.f32 %v1957, %v1991
        %v2024 = vadd.f32 %v1958, %v1992
        %v2025 = vadd.f32 %v1959, %v1993
        %v2026 = vadd.f32 %v1960, %v1994
        %v2027 = vadd.f32 %v1961, %v1995
        %v2028 = vadd.f32 %v1962, %v1996
        %v2029 = vadd.f32 %v1963, %v1997
        %v2030 = vadd.f32 %v1964, %v1998
        %v2031 = vadd.f32 %v1965, %v1999
        %v2032 = vadd.f32 %v1966, %v2000
        %v2033 = vadd.f32 %v1967, %v2001
        %v2034 = vadd.f32 %v1968, %v2002
        %v2035 = vadd.f32 %v1969, %v2003
        %v2036 = vadd.f32 %v1970, %v2004
        %v2037 = vadd.f32 %v1971, %v2005
        %v2038 = vld [vmem:[#allocation8 + $0x7] sm:$0x1]
        %v2039 = vperm.slane %v2038, 0
        %v2040 = vmul.f32 %v822, %v2039
        %v2041 = vmul.f32 %v823, %v2039
        %v2042 = vmul.f32 %v824, %v2039
        %v2043 = vmul.f32 %v825, %v2039
        %v2044 = vmul.f32 %v826, %v2039
        %v2045 = vmul.f32 %v827, %v2039
        %v2046 = vmul.f32 %v828, %v2039
        %v2047 = vmul.f32 %v829, %v2039
        %v2048 = vmul.f32 %v830, %v2039
        %v2049 = vmul.f32 %v831, %v2039
        %v2050 = vmul.f32 %v832, %v2039
        %v2051 = vmul.f32 %v833, %v2039
        %v2052 = vmul.f32 %v834, %v2039
        %v2053 = vmul.f32 %v835, %v2039
        %v2054 = vmul.f32 %v836, %v2039
        %v2055 = vmul.f32 %v837, %v2039
        %v2056 = vmul.f32 %v838, %v2039
        %v2057 = vmul.f32 %v839, %v2039
        %v2058 = vmul.f32 %v840, %v2039
        %v2059 = vmul.f32 %v841, %v2039
        %v2060 = vmul.f32 %v842, %v2039
        %v2061 = vmul.f32 %v843, %v2039
        %v2062 = vmul.f32 %v844, %v2039
        %v2063 = vmul.f32 %v845, %v2039
        %v2064 = vmul.f32 %v846, %v2039
        %v2065 = vmul.f32 %v847, %v2039
        %v2066 = vmul.f32 %v848, %v2039
        %v2067 = vmul.f32 %v849, %v2039
        %v2068 = vmul.f32 %v850, %v2039
        %v2069 = vmul.f32 %v851, %v2039
        %v2070 = vmul.f32 %v852, %v2039
        %v2071 = vmul.f32 %v853, %v2039
        %v2072 = vmul.f32 %v854, %v2039
        %v2073 = vmul.f32 %v855, %v2039
        %v2074 = vmul.f32 %v856, %v2039
        %v2075 = vmul.f32 %v857, %v2039
        %v2076 = vmul.f32 %v858, %v2039
        %v2077 = vmul.f32 %v859, %v2039
        %v2078 = vmul.f32 %v860, %v2039
        %v2079 = vmul.f32 %v861, %v2039
        %v2080 = vmul.f32 %v862, %v2039
        %v2081 = vmul.f32 %v863, %v2039
        %v2082 = vmul.f32 %v864, %v2039
        %v2083 = vmul.f32 %v865, %v2039
        %v2084 = vmul.f32 %v866, %v2039
        %v2085 = vmul.f32 %v867, %v2039
        %v2086 = vmul.f32 %v868, %v2039
        %v2087 = vmul.f32 %v869, %v2039
        %v2136 = vrot.slane %v2040, 1
        %v2137 = vrot.slane %v2041, 1
        %v2138 = vsel %vm1034, %v2136, %v2137
        %v2139 = vrot.slane %v2042, 1
        %v2140 = vsel %vm1034, %v2137, %v2139
        %v2141 = vrot.slane %v2043, 1
        %v2142 = vrot.slane %v2044, 1
        %v2143 = vsel %vm1034, %v2141, %v2142
        %v2144 = vrot.slane %v2045, 1
        %v2145 = vsel %vm1034, %v2142, %v2144
        %v2146 = vrot.slane %v2046, 1
        %v2147 = vrot.slane %v2047, 1
        %v2148 = vsel %vm1034, %v2146, %v2147
        %v2149 = vrot.slane %v2048, 1
        %v2150 = vsel %vm1034, %v2147, %v2149
        %v2151 = vrot.slane %v2049, 1
        %v2152 = vrot.slane %v2050, 1
        %v2153 = vsel %vm1034, %v2151, %v2152
        %v2154 = vrot.slane %v2051, 1
        %v2155 = vsel %vm1034, %v2152, %v2154
        %v2156 = vrot.slane %v2052, 1
        %v2157 = vrot.slane %v2053, 1
        %v2158 = vsel %vm1034, %v2156, %v2157
        %v2159 = vrot.slane %v2054, 1
        %v2160 = vsel %vm1034, %v2157, %v2159
        %v2161 = vrot.slane %v2055, 1
        %v2162 = vrot.slane %v2056, 1
        %v2163 = vsel %vm1034, %v2161, %v2162
        %v2164 = vrot.slane %v2057, 1
        %v2165 = vsel %vm1034, %v2162, %v2164
        %v2166 = vrot.slane %v2058, 1
        %v2167 = vrot.slane %v2059, 1
        %v2168 = vsel %vm1034, %v2166, %v2167
        %v2169 = vrot.slane %v2060, 1
        %v2170 = vsel %vm1034, %v2167, %v2169
        %v2171 = vrot.slane %v2061, 1
        %v2172 = vrot.slane %v2062, 1
        %v2173 = vsel %vm1034, %v2171, %v2172
        %v2174 = vrot.slane %v2063, 1
        %v2175 = vsel %vm1034, %v2172, %v2174
        %v2176 = vrot.slane %v2064, 1
        %v2177 = vrot.slane %v2065, 1
        %v2178 = vsel %vm1034, %v2176, %v2177
        %v2179 = vrot.slane %v2066, 1
        %v2180 = vsel %vm1034, %v2177, %v2179
        %v2181 = vrot.slane %v2067, 1
        %v2182 = vrot.slane %v2068, 1
        %v2183 = vsel %vm1034, %v2181, %v2182
        %v2184 = vrot.slane %v2069, 1
        %v2185 = vsel %vm1034, %v2182, %v2184
        %v2186 = vrot.slane %v2070, 1
        %v2187 = vrot.slane %v2071, 1
        %v2188 = vsel %vm1034, %v2186, %v2187
        %v2189 = vrot.slane %v2072, 1
        %v2190 = vsel %vm1034, %v2187, %v2189
        %v2191 = vrot.slane %v2073, 1
        %v2192 = vrot.slane %v2074, 1
        %v2193 = vsel %vm1034, %v2191, %v2192
        %v2194 = vrot.slane %v2075, 1
        %v2195 = vsel %vm1034, %v2192, %v2194
        %v2196 = vrot.slane %v2076, 1
        %v2197 = vrot.slane %v2077, 1
        %v2198 = vsel %vm1034, %v2196, %v2197
        %v2199 = vrot.slane %v2078, 1
        %v2200 = vsel %vm1034, %v2197, %v2199
        %v2201 = vrot.slane %v2079, 1
        %v2202 = vrot.slane %v2080, 1
        %v2203 = vsel %vm1034, %v2201, %v2202
        %v2204 = vrot.slane %v2081, 1
        %v2205 = vsel %vm1034, %v2202, %v2204
        %v2206 = vrot.slane %v2082, 1
        %v2207 = vrot.slane %v2083, 1
        %v2208 = vsel %vm1034, %v2206, %v2207
        %v2209 = vrot.slane %v2084, 1
        %v2210 = vsel %vm1034, %v2207, %v2209
        %v2211 = vrot.slane %v2085, 1
        %v2212 = vrot.slane %v2086, 1
        %v2213 = vsel %vm1034, %v2211, %v2212
        %v2214 = vrot.slane %v2087, 1
        %v2215 = vsel %vm1034, %v2212, %v2214
        %v2248 = vadd.f32 %v2006, %v2138
        %v2249 = vadd.f32 %v2007, %v2140
        %v2250 = vadd.f32 %v2008, %v2143
        %v2251 = vadd.f32 %v2009, %v2145
        %v2252 = vadd.f32 %v2010, %v2148
        %v2253 = vadd.f32 %v2011, %v2150
        %v2254 = vadd.f32 %v2012, %v2153
        %v2255 = vadd.f32 %v2013, %v2155
        %v2256 = vadd.f32 %v2014, %v2158
        %v2257 = vadd.f32 %v2015, %v2160
        %v2258 = vadd.f32 %v2016, %v2163
        %v2259 = vadd.f32 %v2017, %v2165
        %v2260 = vadd.f32 %v2018, %v2168
        %v2261 = vadd.f32 %v2019, %v2170
        %v2262 = vadd.f32 %v2020, %v2173
        %v2263 = vadd.f32 %v2021, %v2175
        %v2264 = vadd.f32 %v2022, %v2178
        %v2265 = vadd.f32 %v2023, %v2180
        %v2266 = vadd.f32 %v2024, %v2183
        %v2267 = vadd.f32 %v2025, %v2185
        %v2268 = vadd.f32 %v2026, %v2188
        %v2269 = vadd.f32 %v2027, %v2190
        %v2270 = vadd.f32 %v2028, %v2193
        %v2271 = vadd.f32 %v2029, %v2195
        %v2272 = vadd.f32 %v2030, %v2198
        %v2273 = vadd.f32 %v2031, %v2200
        %v2274 = vadd.f32 %v2032, %v2203
        %v2275 = vadd.f32 %v2033, %v2205
        %v2276 = vadd.f32 %v2034, %v2208
        %v2277 = vadd.f32 %v2035, %v2210
        %v2278 = vadd.f32 %v2036, %v2213
        %v2279 = vadd.f32 %v2037, %v2215
        %v2280 = vld [vmem:[#allocation8 + $0x8] sm:$0x1]
        %v2281 = vperm.slane %v2280, 0
        %v2282 = vmul.f32 %v822, %v2281
        %v2283 = vmul.f32 %v823, %v2281
        %v2284 = vmul.f32 %v824, %v2281
        %v2285 = vmul.f32 %v825, %v2281
        %v2286 = vmul.f32 %v826, %v2281
        %v2287 = vmul.f32 %v827, %v2281
        %v2288 = vmul.f32 %v828, %v2281
        %v2289 = vmul.f32 %v829, %v2281
        %v2290 = vmul.f32 %v830, %v2281
        %v2291 = vmul.f32 %v831, %v2281
        %v2292 = vmul.f32 %v832, %v2281
        %v2293 = vmul.f32 %v833, %v2281
        %v2294 = vmul.f32 %v834, %v2281
        %v2295 = vmul.f32 %v835, %v2281
        %v2296 = vmul.f32 %v836, %v2281
        %v2297 = vmul.f32 %v837, %v2281
        %v2298 = vmul.f32 %v838, %v2281
        %v2299 = vmul.f32 %v839, %v2281
        %v2300 = vmul.f32 %v840, %v2281
        %v2301 = vmul.f32 %v841, %v2281
        %v2302 = vmul.f32 %v842, %v2281
        %v2303 = vmul.f32 %v843, %v2281
        %v2304 = vmul.f32 %v844, %v2281
        %v2305 = vmul.f32 %v845, %v2281
        %v2306 = vmul.f32 %v846, %v2281
        %v2307 = vmul.f32 %v847, %v2281
        %v2308 = vmul.f32 %v848, %v2281
        %v2309 = vmul.f32 %v849, %v2281
        %v2310 = vmul.f32 %v850, %v2281
        %v2311 = vmul.f32 %v851, %v2281
        %v2312 = vmul.f32 %v852, %v2281
        %v2313 = vmul.f32 %v853, %v2281
        %v2314 = vmul.f32 %v854, %v2281
        %v2315 = vmul.f32 %v855, %v2281
        %v2316 = vmul.f32 %v856, %v2281
        %v2317 = vmul.f32 %v857, %v2281
        %v2318 = vmul.f32 %v858, %v2281
        %v2319 = vmul.f32 %v859, %v2281
        %v2320 = vmul.f32 %v860, %v2281
        %v2321 = vmul.f32 %v861, %v2281
        %v2322 = vmul.f32 %v862, %v2281
        %v2323 = vmul.f32 %v863, %v2281
        %v2324 = vmul.f32 %v864, %v2281
        %v2325 = vmul.f32 %v865, %v2281
        %v2326 = vmul.f32 %v866, %v2281
        %v2327 = vmul.f32 %v867, %v2281
        %v2328 = vmul.f32 %v868, %v2281
        %v2329 = vmul.f32 %v869, %v2281
        %v2378 = vrot.slane %v2282, 2
        %v2379 = vrot.slane %v2283, 2
        %v2380 = vsel %vm1277, %v2378, %v2379
        %v2381 = vrot.slane %v2284, 2
        %v2382 = vsel %vm1277, %v2379, %v2381
        %v2383 = vrot.slane %v2285, 2
        %v2384 = vrot.slane %v2286, 2
        %v2385 = vsel %vm1277, %v2383, %v2384
        %v2386 = vrot.slane %v2287, 2
        %v2387 = vsel %vm1277, %v2384, %v2386
        %v2388 = vrot.slane %v2288, 2
        %v2389 = vrot.slane %v2289, 2
        %v2390 = vsel %vm1277, %v2388, %v2389
        %v2391 = vrot.slane %v2290, 2
        %v2392 = vsel %vm1277, %v2389, %v2391
        %v2393 = vrot.slane %v2291, 2
        %v2394 = vrot.slane %v2292, 2
        %v2395 = vsel %vm1277, %v2393, %v2394
        %v2396 = vrot.slane %v2293, 2
        %v2397 = vsel %vm1277, %v2394, %v2396
        %v2398 = vrot.slane %v2294, 2
        %v2399 = vrot.slane %v2295, 2
        %v2400 = vsel %vm1277, %v2398, %v2399
        %v2401 = vrot.slane %v2296, 2
        %v2402 = vsel %vm1277, %v2399, %v2401
        %v2403 = vrot.slane %v2297, 2
        %v2404 = vrot.slane %v2298, 2
        %v2405 = vsel %vm1277, %v2403, %v2404
        %v2406 = vrot.slane %v2299, 2
        %v2407 = vsel %vm1277, %v2404, %v2406
        %v2408 = vrot.slane %v2300, 2
        %v2409 = vrot.slane %v2301, 2
        %v2410 = vsel %vm1277, %v2408, %v2409
        %v2411 = vrot.slane %v2302, 2
        %v2412 = vsel %vm1277, %v2409, %v2411
        %v2413 = vrot.slane %v2303, 2
        %v2414 = vrot.slane %v2304, 2
        %v2415 = vsel %vm1277, %v2413, %v2414
        %v2416 = vrot.slane %v2305, 2
        %v2417 = vsel %vm1277, %v2414, %v2416
        %v2418 = vrot.slane %v2306, 2
        %v2419 = vrot.slane %v2307, 2
        %v2420 = vsel %vm1277, %v2418, %v2419
        %v2421 = vrot.slane %v2308, 2
        %v2422 = vsel %vm1277, %v2419, %v2421
        %v2423 = vrot.slane %v2309, 2
        %v2424 = vrot.slane %v2310, 2
        %v2425 = vsel %vm1277, %v2423, %v2424
        %v2426 = vrot.slane %v2311, 2
        %v2427 = vsel %vm1277, %v2424, %v2426
        %v2428 = vrot.slane %v2312, 2
        %v2429 = vrot.slane %v2313, 2
        %v2430 = vsel %vm1277, %v2428, %v2429
        %v2431 = vrot.slane %v2314, 2
        %v2432 = vsel %vm1277, %v2429, %v2431
        %v2433 = vrot.slane %v2315, 2
        %v2434 = vrot.slane %v2316, 2
        %v2435 = vsel %vm1277, %v2433, %v2434
        %v2436 = vrot.slane %v2317, 2
        %v2437 = vsel %vm1277, %v2434, %v2436
        %v2438 = vrot.slane %v2318, 2
        %v2439 = vrot.slane %v2319, 2
        %v2440 = vsel %vm1277, %v2438, %v2439
        %v2441 = vrot.slane %v2320, 2
        %v2442 = vsel %vm1277, %v2439, %v2441
        %v2443 = vrot.slane %v2321, 2
        %v2444 = vrot.slane %v2322, 2
        %v2445 = vsel %vm1277, %v2443, %v2444
        %v2446 = vrot.slane %v2323, 2
        %v2447 = vsel %vm1277, %v2444, %v2446
        %v2448 = vrot.slane %v2324, 2
        %v2449 = vrot.slane %v2325, 2
        %v2450 = vsel %vm1277, %v2448, %v2449
        %v2451 = vrot.slane %v2326, 2
        %v2452 = vsel %vm1277, %v2449, %v2451
        %v2453 = vrot.slane %v2327, 2
        %v2454 = vrot.slane %v2328, 2
        %v2455 = vsel %vm1277, %v2453, %v2454
        %v2456 = vrot.slane %v2329, 2
        %v2457 = vsel %vm1277, %v2454, %v2456
        %v2490 = vadd.f32 %v2248, %v2380
        %v2491 = vadd.f32 %v2249, %v2382
        %v2492 = vadd.f32 %v2250, %v2385
        %v2493 = vadd.f32 %v2251, %v2387
        %v2494 = vadd.f32 %v2252, %v2390
        %v2495 = vadd.f32 %v2253, %v2392
        %v2496 = vadd.f32 %v2254, %v2395
        %v2497 = vadd.f32 %v2255, %v2397
        %v2498 = vadd.f32 %v2256, %v2400
        %v2499 = vadd.f32 %v2257, %v2402
        %v2500 = vadd.f32 %v2258, %v2405
        %v2501 = vadd.f32 %v2259, %v2407
        %v2502 = vadd.f32 %v2260, %v2410
        %v2503 = vadd.f32 %v2261, %v2412
        %v2504 = vadd.f32 %v2262, %v2415
        %v2505 = vadd.f32 %v2263, %v2417
        %v2506 = vadd.f32 %v2264, %v2420
        %v2507 = vadd.f32 %v2265, %v2422
        %v2508 = vadd.f32 %v2266, %v2425
        %v2509 = vadd.f32 %v2267, %v2427
        %v2510 = vadd.f32 %v2268, %v2430
        %v2511 = vadd.f32 %v2269, %v2432
        %v2512 = vadd.f32 %v2270, %v2435
        %v2513 = vadd.f32 %v2271, %v2437
        %v2514 = vadd.f32 %v2272, %v2440
        %v2515 = vadd.f32 %v2273, %v2442
        %v2516 = vadd.f32 %v2274, %v2445
        %v2517 = vadd.f32 %v2275, %v2447
        %v2518 = vadd.f32 %v2276, %v2450
        %v2519 = vadd.f32 %v2277, %v2452
        %v2520 = vadd.f32 %v2278, %v2455
        %v2521 = vadd.f32 %v2279, %v2457
        %v2522 = vld [vmem:[%s5] sm:$0x1]
        %v2524 = vperm.slane %v2522, 0
        %v2526 = vmul.f32 %v2490, %v2524
        %v2527 = vmul.f32 %v2491, %v2524
        %v2528 = vmul.f32 %v2492, %v2524
        %v2529 = vmul.f32 %v2493, %v2524
        %v2530 = vmul.f32 %v2494, %v2524
        %v2531 = vmul.f32 %v2495, %v2524
        %v2532 = vmul.f32 %v2496, %v2524
        %v2533 = vmul.f32 %v2497, %v2524
        %v2534 = vmul.f32 %v2498, %v2524
        %v2535 = vmul.f32 %v2499, %v2524
        %v2536 = vmul.f32 %v2500, %v2524
        %v2537 = vmul.f32 %v2501, %v2524
        %v2538 = vmul.f32 %v2502, %v2524
        %v2539 = vmul.f32 %v2503, %v2524
        %v2540 = vmul.f32 %v2504, %v2524
        %v2541 = vmul.f32 %v2505, %v2524
        %v2542 = vmul.f32 %v2506, %v2524
        %v2543 = vmul.f32 %v2507, %v2524
        %v2544 = vmul.f32 %v2508, %v2524
        %v2545 = vmul.f32 %v2509, %v2524
        %v2546 = vmul.f32 %v2510, %v2524
        %v2547 = vmul.f32 %v2511, %v2524
        %v2548 = vmul.f32 %v2512, %v2524
        %v2549 = vmul.f32 %v2513, %v2524
        %v2550 = vmul.f32 %v2514, %v2524
        %v2551 = vmul.f32 %v2515, %v2524
        %v2552 = vmul.f32 %v2516, %v2524
        %v2553 = vmul.f32 %v2517, %v2524
        %v2554 = vmul.f32 %v2518, %v2524
        %v2555 = vmul.f32 %v2519, %v2524
        %v2556 = vmul.f32 %v2520, %v2524
        %v2557 = vmul.f32 %v2521, %v2524
        %v2558 = vld [vmem:[%s6] sm:$0x1]
        %v2560 = vperm.slane %v2558, 0
        %v2562 = vadd.f32 %v2526, %v2560
        %v2563 = vadd.f32 %v2527, %v2560
        %v2564 = vadd.f32 %v2528, %v2560
        %v2565 = vadd.f32 %v2529, %v2560
        %v2566 = vadd.f32 %v2530, %v2560
        %v2567 = vadd.f32 %v2531, %v2560
        %v2568 = vadd.f32 %v2532, %v2560
        %v2569 = vadd.f32 %v2533, %v2560
        %v2570 = vadd.f32 %v2534, %v2560
        %v2571 = vadd.f32 %v2535, %v2560
        %v2572 = vadd.f32 %v2536, %v2560
        %v2573 = vadd.f32 %v2537, %v2560
        %v2574 = vadd.f32 %v2538, %v2560
        %v2575 = vadd.f32 %v2539, %v2560
        %v2576 = vadd.f32 %v2540, %v2560
        %v2577 = vadd.f32 %v2541, %v2560
        %v2578 = vadd.f32 %v2542, %v2560
        %v2579 = vadd.f32 %v2543, %v2560
        %v2580 = vadd.f32 %v2544, %v2560
        %v2581 = vadd.f32 %v2545, %v2560
        %v2582 = vadd.f32 %v2546, %v2560
        %v2583 = vadd.f32 %v2547, %v2560
        %v2584 = vadd.f32 %v2548, %v2560
        %v2585 = vadd.f32 %v2549, %v2560
        %v2586 = vadd.f32 %v2550, %v2560
        %v2587 = vadd.f32 %v2551, %v2560
        %v2588 = vadd.f32 %v2552, %v2560
        %v2589 = vadd.f32 %v2553, %v2560
        %v2590 = vadd.f32 %v2554, %v2560
        %v2591 = vadd.f32 %v2555, %v2560
        %v2592 = vadd.f32 %v2556, %v2560
        %v2593 = vadd.f32 %v2557, %v2560
        %v2594 = vmax.f32 %v2562, 0.0
        %v2595 = vmax.f32 %v2563, 0.0
        %v2596 = vmax.f32 %v2564, 0.0
        %v2597 = vmax.f32 %v2565, 0.0
        %v2598 = vmax.f32 %v2566, 0.0
        %v2599 = vmax.f32 %v2567, 0.0
        %v2600 = vmax.f32 %v2568, 0.0
        %v2601 = vmax.f32 %v2569, 0.0
        %v2602 = vmax.f32 %v2570, 0.0
        %v2603 = vmax.f32 %v2571, 0.0
        %v2604 = vmax.f32 %v2572, 0.0
        %v2605 = vmax.f32 %v2573, 0.0
        %v2606 = vmax.f32 %v2574, 0.0
        %v2607 = vmax.f32 %v2575, 0.0
        %v2608 = vmax.f32 %v2576, 0.0
        %v2609 = vmax.f32 %v2577, 0.0
        %v2610 = vmax.f32 %v2578, 0.0
        %v2611 = vmax.f32 %v2579, 0.0
        %v2612 = vmax.f32 %v2580, 0.0
        %v2613 = vmax.f32 %v2581, 0.0
        %v2614 = vmax.f32 %v2582, 0.0
        %v2615 = vmax.f32 %v2583, 0.0
        %v2616 = vmax.f32 %v2584, 0.0
        %v2617 = vmax.f32 %v2585, 0.0
        %v2618 = vmax.f32 %v2586, 0.0
        %v2619 = vmax.f32 %v2587, 0.0
        %v2620 = vmax.f32 %v2588, 0.0
        %v2621 = vmax.f32 %v2589, 0.0
        %v2622 = vmax.f32 %v2590, 0.0
        %v2623 = vmax.f32 %v2591, 0.0
        %v2624 = vmax.f32 %v2592, 0.0
        %v2625 = vmax.f32 %v2593, 0.0
        %v2626 = vmin.f32 %v2594, 6.0
        %v2627 = vmin.f32 %v2595, 6.0
        %v2628 = vmin.f32 %v2596, 6.0
        %v2629 = vmin.f32 %v2597, 6.0
        %v2630 = vmin.f32 %v2598, 6.0
        %v2631 = vmin.f32 %v2599, 6.0
        %v2632 = vmin.f32 %v2600, 6.0
        %v2633 = vmin.f32 %v2601, 6.0
        %v2634 = vmin.f32 %v2602, 6.0
        %v2635 = vmin.f32 %v2603, 6.0
        %v2636 = vmin.f32 %v2604, 6.0
        %v2637 = vmin.f32 %v2605, 6.0
        %v2638 = vmin.f32 %v2606, 6.0
        %v2639 = vmin.f32 %v2607, 6.0
        %v2640 = vmin.f32 %v2608, 6.0
        %v2641 = vmin.f32 %v2609, 6.0
        %v2642 = vmin.f32 %v2610, 6.0
        %v2643 = vmin.f32 %v2611, 6.0
        %v2644 = vmin.f32 %v2612, 6.0
        %v2645 = vmin.f32 %v2613, 6.0
        %v2646 = vmin.f32 %v2614, 6.0
        %v2647 = vmin.f32 %v2615, 6.0
        %v2648 = vmin.f32 %v2616, 6.0
        %v2649 = vmin.f32 %v2617, 6.0
        %v2650 = vmin.f32 %v2618, 6.0
        %v2651 = vmin.f32 %v2619, 6.0
        %v2652 = vmin.f32 %v2620, 6.0
        %v2653 = vmin.f32 %v2621, 6.0
        %v2654 = vmin.f32 %v2622, 6.0
        %v2655 = vmin.f32 %v2623, 6.0
        %v2656 = vmin.f32 %v2624, 6.0
        %v2657 = vmin.f32 %v2625, 6.0
        %v2658 = vld [vmem:[#allocation9] sm:$0xff]
        %v2659 = vld [vmem:[#allocation9 + $0x8] sm:$0xff]
        %v2660 = vld [vmem:[#allocation9 + $0x10] sm:$0xff]
        %v2661 = vld [vmem:[#allocation9 + $0x18] sm:$0xff]
        %v2662 = vld [vmem:[#allocation9 + $0x20] sm:$0xff]
        %v2663 = vld [vmem:[#allocation9 + $0x28] sm:$0xff]
        %v2664 = vld [vmem:[#allocation9 + $0x30] sm:$0xff]
        %v2665 = vld [vmem:[#allocation9 + $0x38] sm:$0xff]
        %v2666 = vld [vmem:[#allocation9 + $0x40] sm:$0xff]
        %v2667 = vld [vmem:[#allocation9 + $0x48] sm:$0xff]
        %v2668 = vld [vmem:[#allocation9 + $0x50] sm:$0xff]
        %v2669 = vld [vmem:[#allocation9 + $0x58] sm:$0xff]
        %v2670 = vld [vmem:[#allocation9 + $0x60] sm:$0xff]
        %v2671 = vld [vmem:[#allocation9 + $0x68] sm:$0xff]
        %v2672 = vld [vmem:[#allocation9 + $0x70] sm:$0xff]
        %v2673 = vld [vmem:[#allocation9 + $0x78] sm:$0xff]
        %2674 = vmatpush.msra.mxu0 %v2673
        %2675 = vmatpush.msra.mxu0 %v2672
        %2676 = vmatpush.msra.mxu0 %v2671
        %2677 = vmatpush.msra.mxu0 %v2670
        %2678 = vmatpush.msra.mxu0 %v2669
        %2679 = vmatpush.msra.mxu0 %v2668
        %2680 = vmatpush.msra.mxu0 %v2667
        %2681 = vmatpush.msra.mxu0 %v2666
        %2682 = vmatpush.msra.mxu0 %v2665
        %2683 = vmatpush.msra.mxu0 %v2664
        %2684 = vmatpush.msra.mxu0 %v2663
        %2685 = vmatpush.msra.mxu0 %v2662
        %2686 = vmatpush.msra.mxu0 %v2661
        %2687 = vmatpush.msra.mxu0 %v2660
        %2688 = vmatpush.msra.mxu0 %v2659
        %2689 = vmatpush.msra.mxu0 %v2658
        %2690 = vmatmul.f32.gmra.mxu0 %v2626
        %v2691 = vpop.f32.mrf.mxu0
        %v2692 = vadd.f32 0.0, %v2691
        %2693 = vmatmul.f32.gmra.mxu0 %v2627
        %v2694 = vpop.f32.mrf.mxu0
        %v2695 = vadd.f32 0.0, %v2694
        %2696 = vmatmul.f32.gmra.mxu0 %v2628
        %v2697 = vpop.f32.mrf.mxu0
        %v2698 = vadd.f32 0.0, %v2697
        %2699 = vmatmul.f32.gmra.mxu0 %v2629
        %v2700 = vpop.f32.mrf.mxu0
        %v2701 = vadd.f32 0.0, %v2700
        %2702 = vmatmul.f32.gmra.mxu0 %v2630
        %v2703 = vpop.f32.mrf.mxu0
        %v2704 = vadd.f32 0.0, %v2703
        %2705 = vmatmul.f32.gmra.mxu0 %v2631
        %v2706 = vpop.f32.mrf.mxu0
        %v2707 = vadd.f32 0.0, %v2706
        %2708 = vmatmul.f32.gmra.mxu0 %v2632
        %v2709 = vpop.f32.mrf.mxu0
        %v2710 = vadd.f32 0.0, %v2709
        %2711 = vmatmul.f32.gmra.mxu0 %v2633
        %v2712 = vpop.f32.mrf.mxu0
        %v2713 = vadd.f32 0.0, %v2712
        %2714 = vmatmul.f32.gmra.mxu0 %v2634
        %v2715 = vpop.f32.mrf.mxu0
        %v2716 = vadd.f32 0.0, %v2715
        %2717 = vmatmul.f32.gmra.mxu0 %v2635
        %v2718 = vpop.f32.mrf.mxu0
        %v2719 = vadd.f32 0.0, %v2718
        %2720 = vmatmul.f32.gmra.mxu0 %v2636
        %v2721 = vpop.f32.mrf.mxu0
        %v2722 = vadd.f32 0.0, %v2721
        %2723 = vmatmul.f32.gmra.mxu0 %v2637
        %v2724 = vpop.f32.mrf.mxu0
        %v2725 = vadd.f32 0.0, %v2724
        %2726 = vmatmul.f32.gmra.mxu0 %v2638
        %v2727 = vpop.f32.mrf.mxu0
        %v2728 = vadd.f32 0.0, %v2727
        %2729 = vmatmul.f32.gmra.mxu0 %v2639
        %v2730 = vpop.f32.mrf.mxu0
        %v2731 = vadd.f32 0.0, %v2730
        %2732 = vmatmul.f32.gmra.mxu0 %v2640
        %v2733 = vpop.f32.mrf.mxu0
        %v2734 = vadd.f32 0.0, %v2733
        %2735 = vmatmul.f32.gmra.mxu0 %v2641
        %v2736 = vpop.f32.mrf.mxu0
        %v2737 = vadd.f32 0.0, %v2736
        %2738 = vmatmul.f32.gmra.mxu0 %v2642
        %v2739 = vpop.f32.mrf.mxu0
        %v2740 = vadd.f32 0.0, %v2739
        %2741 = vmatmul.f32.gmra.mxu0 %v2643
        %v2742 = vpop.f32.mrf.mxu0
        %v2743 = vadd.f32 0.0, %v2742
        %2744 = vmatmul.f32.gmra.mxu0 %v2644
        %v2745 = vpop.f32.mrf.mxu0
        %v2746 = vadd.f32 0.0, %v2745
        %2747 = vmatmul.f32.gmra.mxu0 %v2645
        %v2748 = vpop.f32.mrf.mxu0
        %v2749 = vadd.f32 0.0, %v2748
        %2750 = vmatmul.f32.gmra.mxu0 %v2646
        %v2751 = vpop.f32.mrf.mxu0
        %v2752 = vadd.f32 0.0, %v2751
        %2753 = vmatmul.f32.gmra.mxu0 %v2647
        %v2754 = vpop.f32.mrf.mxu0
        %v2755 = vadd.f32 0.0, %v2754
        %2756 = vmatmul.f32.gmra.mxu0 %v2648
        %v2757 = vpop.f32.mrf.mxu0
        %v2758 = vadd.f32 0.0, %v2757
        %2759 = vmatmul.f32.gmra.mxu0 %v2649
        %v2760 = vpop.f32.mrf.mxu0
        %v2761 = vadd.f32 0.0, %v2760
        %2762 = vmatmul.f32.gmra.mxu0 %v2650
        %v2763 = vpop.f32.mrf.mxu0
        %v2764 = vadd.f32 0.0, %v2763
        %2765 = vmatmul.f32.gmra.mxu0 %v2651
        %v2766 = vpop.f32.mrf.mxu0
        %v2767 = vadd.f32 0.0, %v2766
        %2768 = vmatmul.f32.gmra.mxu0 %v2652
        %v2769 = vpop.f32.mrf.mxu0
        %v2770 = vadd.f32 0.0, %v2769
        %2771 = vmatmul.f32.gmra.mxu0 %v2653
        %v2772 = vpop.f32.mrf.mxu0
        %v2773 = vadd.f32 0.0, %v2772
        %2774 = vmatmul.f32.gmra.mxu0 %v2654
        %v2775 = vpop.f32.mrf.mxu0
        %v2776 = vadd.f32 0.0, %v2775
        %2777 = vmatmul.f32.gmra.mxu0 %v2655
        %v2778 = vpop.f32.mrf.mxu0
        %v2779 = vadd.f32 0.0, %v2778
        %2780 = vmatmul.f32.gmra.mxu0 %v2656
        %v2781 = vpop.f32.mrf.mxu0
        %v2782 = vadd.f32 0.0, %v2781
        %2783 = vmatmul.f32.gmra.mxu0 %v2657
        %v2784 = vpop.f32.mrf.mxu0
        %v2785 = vadd.f32 0.0, %v2784
        %2786 = vdwg.mxu0
        %v2787 = vld [vmem:[%s8] sm:$0x1]
        %v2789 = vperm.slane %v2787, 0
        %v2791 = vmul.f32 %v2692, %v2789
        %v2792 = vmul.f32 %v2695, %v2789
        %v2793 = vmul.f32 %v2698, %v2789
        %v2794 = vmul.f32 %v2701, %v2789
        %v2795 = vmul.f32 %v2704, %v2789
        %v2796 = vmul.f32 %v2707, %v2789
        %v2797 = vmul.f32 %v2710, %v2789
        %v2798 = vmul.f32 %v2713, %v2789
        %v2799 = vmul.f32 %v2716, %v2789
        %v2800 = vmul.f32 %v2719, %v2789
        %v2801 = vmul.f32 %v2722, %v2789
        %v2802 = vmul.f32 %v2725, %v2789
        %v2803 = vmul.f32 %v2728, %v2789
        %v2804 = vmul.f32 %v2731, %v2789
        %v2805 = vmul.f32 %v2734, %v2789
        %v2806 = vmul.f32 %v2737, %v2789
        %v2807 = vmul.f32 %v2740, %v2789
        %v2808 = vmul.f32 %v2743, %v2789
        %v2809 = vmul.f32 %v2746, %v2789
        %v2810 = vmul.f32 %v2749, %v2789
        %v2811 = vmul.f32 %v2752, %v2789
        %v2812 = vmul.f32 %v2755, %v2789
        %v2813 = vmul.f32 %v2758, %v2789
        %v2814 = vmul.f32 %v2761, %v2789
        %v2815 = vmul.f32 %v2764, %v2789
        %v2816 = vmul.f32 %v2767, %v2789
        %v2817 = vmul.f32 %v2770, %v2789
        %v2818 = vmul.f32 %v2773, %v2789
        %v2819 = vmul.f32 %v2776, %v2789
        %v2820 = vmul.f32 %v2779, %v2789
        %v2821 = vmul.f32 %v2782, %v2789
        %v2822 = vmul.f32 %v2785, %v2789
        %v2823 = vld [vmem:[%s9] sm:$0x1]
        %v2825 = vperm.slane %v2823, 0
        %v2827 = vadd.f32 %v2791, %v2825
        %v2828 = vadd.f32 %v2792, %v2825
        %v2829 = vadd.f32 %v2793, %v2825
        %v2830 = vadd.f32 %v2794, %v2825
        %v2831 = vadd.f32 %v2795, %v2825
        %v2832 = vadd.f32 %v2796, %v2825
        %v2833 = vadd.f32 %v2797, %v2825
        %v2834 = vadd.f32 %v2798, %v2825
        %v2835 = vadd.f32 %v2799, %v2825
        %v2836 = vadd.f32 %v2800, %v2825
        %v2837 = vadd.f32 %v2801, %v2825
        %v2838 = vadd.f32 %v2802, %v2825
        %v2839 = vadd.f32 %v2803, %v2825
        %v2840 = vadd.f32 %v2804, %v2825
        %v2841 = vadd.f32 %v2805, %v2825
        %v2842 = vadd.f32 %v2806, %v2825
        %v2843 = vadd.f32 %v2807, %v2825
        %v2844 = vadd.f32 %v2808, %v2825
        %v2845 = vadd.f32 %v2809, %v2825
        %v2846 = vadd.f32 %v2810, %v2825
        %v2847 = vadd.f32 %v2811, %v2825
        %v2848 = vadd.f32 %v2812, %v2825
        %v2849 = vadd.f32 %v2813, %v2825
        %v2850 = vadd.f32 %v2814, %v2825
        %v2851 = vadd.f32 %v2815, %v2825
        %v2852 = vadd.f32 %v2816, %v2825
        %v2853 = vadd.f32 %v2817, %v2825
        %v2854 = vadd.f32 %v2818, %v2825
        %v2855 = vadd.f32 %v2819, %v2825
        %v2856 = vadd.f32 %v2820, %v2825
        %v2857 = vadd.f32 %v2821, %v2825
        %v2858 = vadd.f32 %v2822, %v2825
        %v2859 = vadd.f32 %v2827, %v432
        %v2860 = vadd.f32 %v2828, %v433
        %v2861 = vadd.f32 %v2829, %v434
        %v2862 = vadd.f32 %v2830, %v435
        %v2863 = vadd.f32 %v2831, %v436
        %v2864 = vadd.f32 %v2832, %v437
        %v2865 = vadd.f32 %v2833, %v438
        %v2866 = vadd.f32 %v2834, %v439
        %v2867 = vadd.f32 %v2835, %v440
        %v2868 = vadd.f32 %v2836, %v441
        %v2869 = vadd.f32 %v2837, %v442
        %v2870 = vadd.f32 %v2838, %v443
        %v2871 = vadd.f32 %v2839, %v444
        %v2872 = vadd.f32 %v2840, %v445
        %v2873 = vadd.f32 %v2841, %v446
        %v2874 = vadd.f32 %v2842, %v447
        %v2875 = vadd.f32 %v2843, %v448
        %v2876 = vadd.f32 %v2844, %v449
        %v2877 = vadd.f32 %v2845, %v450
        %v2878 = vadd.f32 %v2846, %v451
        %v2879 = vadd.f32 %v2847, %v452
        %v2880 = vadd.f32 %v2848, %v453
        %v2881 = vadd.f32 %v2849, %v454
        %v2882 = vadd.f32 %v2850, %v455
        %v2883 = vadd.f32 %v2851, %v456
        %v2884 = vadd.f32 %v2852, %v457
        %v2885 = vadd.f32 %v2853, %v458
        %v2886 = vadd.f32 %v2854, %v459
        %v2887 = vadd.f32 %v2855, %v460
        %v2888 = vadd.f32 %v2856, %v461
        %v2889 = vadd.f32 %v2857, %v462
        %v2890 = vadd.f32 %v2858, %v463
        %2891 = vst [vmem:[%s429] sm:$0xff] %v2859
        %2892 = vst [vmem:[%s429 + $0x8] sm:$0xff] %v2860
        %2893 = vst [vmem:[%s429 + $0x10] sm:$0xff] %v2861
        %2894 = vst [vmem:[%s429 + $0x18] sm:$0xff] %v2862
        %2895 = vst [vmem:[%s429 + $0x20] sm:$0xff] %v2863
        %2896 = vst [vmem:[%s429 + $0x28] sm:$0xff] %v2864
        %2897 = vst [vmem:[%s429 + $0x30] sm:$0xff] %v2865
        %2898 = vst [vmem:[%s429 + $0x38] sm:$0xff] %v2866
        %2899 = vst [vmem:[%s429 + $0x40] sm:$0xff] %v2867
        %2900 = vst [vmem:[%s429 + $0x48] sm:$0xff] %v2868
        %2901 = vst [vmem:[%s429 + $0x50] sm:$0xff] %v2869
        %2902 = vst [vmem:[%s429 + $0x58] sm:$0xff] %v2870
        %2903 = vst [vmem:[%s429 + $0x60] sm:$0xff] %v2871
        %2904 = vst [vmem:[%s429 + $0x68] sm:$0xff] %v2872
        %2905 = vst [vmem:[%s429 + $0x70] sm:$0xff] %v2873
        %2906 = vst [vmem:[%s429 + $0x78] sm:$0xff] %v2874
        %2907 = vst [vmem:[%s429 + $0x80] sm:$0xff] %v2875
        %2908 = vst [vmem:[%s429 + $0x88] sm:$0xff] %v2876
        %2909 = vst [vmem:[%s429 + $0x90] sm:$0xff] %v2877
        %2910 = vst [vmem:[%s429 + $0x98] sm:$0xff] %v2878
        %2911 = vst [vmem:[%s429 + $0xa0] sm:$0xff] %v2879
        %2912 = vst [vmem:[%s429 + $0xa8] sm:$0xff] %v2880
        %2913 = vst [vmem:[%s429 + $0xb0] sm:$0xff] %v2881
        %2914 = vst [vmem:[%s429 + $0xb8] sm:$0xff] %v2882
        %2915 = vst [vmem:[%s429 + $0xc0] sm:$0xff] %v2883
        %2916 = vst [vmem:[%s429 + $0xc8] sm:$0xff] %v2884
        %2917 = vst [vmem:[%s429 + $0xd0] sm:$0xff] %v2885
        %2918 = vst [vmem:[%s429 + $0xd8] sm:$0xff] %v2886
        %2919 = vst [vmem:[%s429 + $0xe0] sm:$0xff] %v2887
        %2920 = vst [vmem:[%s429 + $0xe8] sm:$0xff] %v2888
        %2921 = vst [vmem:[%s429 + $0xf0] sm:$0xff] %v2889
        %2922 = vst [vmem:[%s429 + $0xf8] sm:$0xff] %v2890
        %s2923 = sand.u32 %s252, 1
        %s2924 = scalar_lea.sflag [#allocation5], %s2923
        %s2925 = sand.u32 %s252, 1
        %s2926 = smul.addr %s2925, 256
        %s2927 = scalar_lea.vmem [#allocation11], %s2926
        // Predicated region
        $region77: #{tpu_custom_call.1} parent=59 // pred_check
          %p2928 = pneg %p262
        $region78: #{tpu_custom_call.1} parent=59 // pred_check_branch
          %2930 = sbr.rel (%p2928) target = $region80
        $region79: #{tpu_custom_call.1} parent=59 // pred_region
          %s2931 = smul.u32 32, %s29
          %2933 = vsyncadd %s2924, 0
          %s2934 = smul.addr %s2931, 8
          %s2935 = scalar_lea.hbm %s10, %s2934
          %s2936 = sshll.u32 %s2927, 4
          %s2937 = int_to_ptr.vmem [resolvable:$true] %s2936
          %s2938 = sshll.u32 %s2935, 4
          %s2939 = int_to_ptr.hbm [resolvable:$true] %s2938
          %2944 = dma.vmem_to_hbm [thread:$0]  %s2937, 4096, %s2939, %s2924, 128, 128, 8
        $region80: #{tpu_custom_call.1} parent=59 // pred_fallthru
          _
      $region60: #{tpu_custom_call.1} parent=5 // pred_fallthru
        _
      %p2945 = scmp.le.s32.totalorder 2, %s24
      // Predicated region
      $region81: #{tpu_custom_call.1} parent=5 // pred_check
        %p2946 = pneg %p2945
      $region82: #{tpu_custom_call.1} parent=5 // pred_check_branch
        %2948 = sbr.rel (%p2946) target = $region84
      $region83: #{tpu_custom_call.1} parent=5 // pred_region
        %s2949 = ssub.s32 %s24, 2
        // Predicated region
        $region85: #{tpu_custom_call.1} parent=83 // pred_check
          %p2950 = pneg %p268
        $region86: #{tpu_custom_call.1} parent=83 // pred_check_branch
          %2952 = sbr.rel (%p2950) target = $region88
        $region87: #{tpu_custom_call.1} parent=83 // pred_region
          %s2953 = sand.u32 %s253, 1
          %s2954 = scalar_lea.sflag [#allocation5], %s2953
          %s2955 = sand.u32 %s253, 1
          %s2956 = smul.addr %s2955, 256
          %s2957 = scalar_lea.vmem [#allocation11], %s2956
          %2959 = dma.done %s2954, 4096
        $region88: #{tpu_custom_call.1} parent=83 // pred_fallthru
          _
      $region84: #{tpu_custom_call.1} parent=5 // pred_fallthru
        _
    $region6: #{tpu_custom_call.1} parent=1 // loop_footer
      %s28 = sadd.s32 1, %s24
    $region7: #{tpu_custom_call.1} parent=1 // loop_footer_branch
      %23 = sbr.rel target = $region3
    $region8: #{tpu_custom_call.1} parent=1 // loop_exit
      _
    %2960 = vsyncpa [#allocation4], 1
    %s2961 = scalar_lea.sflag [#allocation4], 1
    %2962 = vsyncpa %s2961, 1
    %2963 = vsyncpa [#allocation7], 1
    %2964 = vsyncpa [#allocation10], 1
    %2965 = vsyncpa [#allocation5], 1
    %s2966 = scalar_lea.sflag [#allocation5], 1
    %2967 = vsyncpa %s2966, 1

</llo_original>
